<compile_context>
chip_gen: v5e
topology: v5e:2x2
jax: 0.10.0
libtpu: 0.0.40
codegen_flags: <defaults>
</compile_context>

<pallas_src>
import math

import jax
import jax.numpy as jnp
from jax.experimental import pallas as pl
from jax.experimental.pallas import tpu as pltpu

N_EMBD = 64
N_HEAD = 4
HEAD_DIM = N_EMBD // N_HEAD
LN_EPS = 1e-5
MASK_NEG = -1e30
MAX_ROWS_PER_STEP = 256     # flattened tokens packed along the score lane axis


def _layernorm(x, gamma, beta):
    mean = jnp.mean(x, axis=-1, keepdims=True)
    var = jnp.mean((x - mean) ** 2, axis=-1, keepdims=True)
    return (x - mean) * jax.lax.rsqrt(var + LN_EPS) * gamma + beta


def _make_kernel(rows, e):
    """Kernel processing `rows` flattened tokens (one batch tile) per step."""
    h = N_HEAD
    hd = HEAD_DIM

    def kernel(x_ref, mask_ref, wqkv_ref, bqkv_ref, wo_ref,
               w1_ref, bf1_ref, w2_ref, vecs_ref, o_ref, ctx_ref):
        x = x_ref[...]                                    # (rows, e) f32
        mask = mask_ref[...]                              # (rows, rows) additive

        # Fused QKV in-projection: one bf16 MXU matmul, f32 accumulate.
        # q columns are already pre-scaled by 1/sqrt(hd) on the host.
        qkv = jnp.dot(x.astype(jnp.bfloat16), wqkv_ref[...],
                      preferred_element_type=jnp.float32) + bqkv_ref[...]

        bo = vecs_ref[0:1, :]
        g1 = vecs_ref[1:2, :]
        be1 = vecs_ref[2:3, :]
        bf2 = vecs_ref[3:4, :]
        g2 = vecs_ref[4:5, :]
        be2 = vecs_ref[5:6, :]

        # --- self-attention ------------------------------------------------
        # Batch elements are packed along the score lane axis; the block-
        # diagonal additive mask keeps them independent.  4 heads, each one
        # lane-dense score matmul + batched softmax + one context matmul.
        for hh in range(h):
            c0 = hh * hd
            q_h = qkv[:, c0:c0 + hd].astype(jnp.bfloat16)            # (rows, hd)
            k_h = qkv[:, e + c0:e + c0 + hd].astype(jnp.bfloat16)
            v_h = qkv[:, 2 * e + c0:2 * e + c0 + hd].astype(jnp.bfloat16)
            scores = jax.lax.dot_general(
                q_h, k_h, (((1,), (1,)), ((), ())),
                preferred_element_type=jnp.float32)                  # (rows, rows)
            scores = scores + mask
            scores = scores - jnp.max(scores, axis=-1, keepdims=True)
            p = jnp.exp(scores)
            p = p * pl.reciprocal(jnp.sum(p, axis=-1, keepdims=True),
                                  approx=True)
            ctx_ref[:, c0:c0 + hd] = jnp.dot(
                p.astype(jnp.bfloat16), v_h,
                preferred_element_type=jnp.float32).astype(jnp.bfloat16)

        # Heads already assembled along lanes in ctx_ref: single out-projection.
        attn = jnp.dot(ctx_ref[...], wo_ref[...],
                       preferred_element_type=jnp.float32) + bo      # (rows, e)

        # dropout1: identity (eval mode)
        out1 = _layernorm(attn + x, g1, be1)

        # --- feed forward ---------------------------------------------------
        hdn = jnp.dot(out1.astype(jnp.bfloat16), w1_ref[...],
                      preferred_element_type=jnp.float32) + bf1_ref[...]
        hdn = jnp.maximum(hdn, 0.0)
        ff = jnp.dot(hdn.astype(jnp.bfloat16), w2_ref[...],
                     preferred_element_type=jnp.float32) + bf2
        # FeedFoward Dropout + dropout2: identity (eval mode)

        o_ref[...] = _layernorm(out1 + ff, g2, be2)

    return kernel


def _batch_tile(b, s):
    """Batch elements per grid step (rows per step = bt * s)."""
    bt_cap = max(1, MAX_ROWS_PER_STEP // s)
    bt_max = min(b, bt_cap)
    if b > 1:
        # keep >= 2 grid steps so v7x can shard the grid across both TCs
        bt_max = min(bt_max, max(1, b // 2))
    for bt in range(bt_max, 0, -1):            # prefer 8-aligned row counts
        if b % bt == 0 and (bt * s) % 8 == 0:
            return bt
    for bt in range(bt_max, 0, -1):
        if b % bt == 0:
            return bt
    return b


def transformer_block(x, padding, params):
    """x: (B, S, E) f32; padding: (B, S) (nonzero = masked key position)."""
    B, S, E = x.shape
    assert E == N_EMBD

    BT = _batch_tile(B, S)
    rows = BT * S
    if B // BT > 1 and rows % 8 != 0:
        BT, rows = B, B * S                    # fall back to a single grid step
    n_steps = B // BT

    # Host-side weight fusion / scale folding / bf16 casts (done once).
    scale = 1.0 / math.sqrt(HEAD_DIM)
    bf16 = jnp.bfloat16
    w_qkv = jnp.concatenate(
        [params["wq"] * scale, params["wk"], params["wv"]], axis=1).astype(bf16)
    b_qkv = jnp.concatenate(
        [params["bq"] * scale, params["bk"], params["bv"]], axis=1)      # (1,3E) f32
    vecs = jnp.concatenate(
        [params["bo"], params["g1"], params["be1"],
         params["bf2"], params["g2"], params["be2"]], axis=0)            # (6,E) f32
    wo = params["wo"].astype(bf16)
    w1 = params["w1"].astype(bf16)
    w2 = params["w2"].astype(bf16)

    x2 = x.reshape(B * S, E).astype(jnp.float32)

    # Additive attention mask: block-diagonal over the batch elements packed
    # into one step, fused with the key-padding mask; finite (-1e30) so no NaN.
    pad = padding.astype(jnp.float32).reshape(n_steps, rows) > 0.5
    bidx = jnp.arange(rows, dtype=jnp.int32) // S
    other_batch = bidx[:, None] != bidx[None, :]                         # (rows, rows)
    masked = other_batch[None, :, :] | pad[:, None, :]                   # (n_steps, rows, rows)
    mask_add = jnp.where(masked, jnp.float32(MASK_NEG),
                         jnp.float32(0.0)).reshape(n_steps * rows, rows)

    weight_args = (w_qkv, b_qkv, wo, w1, params["bf1"], w2, vecs)

    def const_spec(a):
        nd = a.ndim
        return pl.BlockSpec(a.shape, lambda i, _n=nd: (0,) * _n)

    in_specs = [
        pl.BlockSpec((rows, E), lambda i: (i, 0)),        # x tokens
        pl.BlockSpec((rows, rows), lambda i: (i, 0)),     # additive attention mask
    ] + [const_spec(a) for a in weight_args]

    out = pl.pallas_call(
        _make_kernel(rows, E),
        out_shape=jax.ShapeDtypeStruct((B * S, E), jnp.float32),
        grid_spec=pltpu.PrefetchScalarGridSpec(
            num_scalar_prefetch=0,
            grid=(n_steps,),
            in_specs=in_specs,
            out_specs=pl.BlockSpec((rows, E), lambda i: (i, 0)),
            scratch_shapes=[pltpu.VMEM((rows, E), jnp.bfloat16)],
        ),
        compiler_params=pltpu.CompilerParams(
            dimension_semantics=("parallel",)),
    )(x2, mask_add, *weight_args)
    return out.reshape(B, S, E)


def make_params(key, n_embd=N_EMBD):
    ks = jax.random.split(key, 12)
    s = 0.05
    f32 = jnp.float32
    params = {
        # attention in-projection (stored transposed: x @ W)
        "wq": jax.random.normal(ks[0], (n_embd, n_embd), f32) * s,
        "wk": jax.random.normal(ks[1], (n_embd, n_embd), f32) * s,
        "wv": jax.random.normal(ks[2], (n_embd, n_embd), f32) * s,
        "bq": jax.random.normal(ks[3], (1, n_embd), f32) * s,
        "bk": jax.random.normal(ks[4], (1, n_embd), f32) * s,
        "bv": jax.random.normal(ks[5], (1, n_embd), f32) * s,
        # attention out-projection
        "wo": jax.random.normal(ks[6], (n_embd, n_embd), f32) * s,
        "bo": jax.random.normal(ks[7], (1, n_embd), f32) * s,
        # layer norms
        "g1": jnp.ones((1, n_embd), f32),
        "be1": jnp.zeros((1, n_embd), f32),
        "g2": jnp.ones((1, n_embd), f32),
        "be2": jnp.zeros((1, n_embd), f32),
        # feed forward
        "w1": jax.random.normal(ks[8], (n_embd, 4 * n_embd), f32) * s,
        "bf1": jax.random.normal(ks[9], (1, 4 * n_embd), f32) * s,
        "w2": jax.random.normal(ks[10], (4 * n_embd, n_embd), f32) * s,
        "bf2": jax.random.normal(ks[11], (1, n_embd), f32) * s,
    }
    return params


def reference(x, padding, p):
    """Pure-JAX f32 reference reproducing the PyTorch forward (eval-mode dropout)."""
    B, S, E = x.shape
    q = x @ p["wq"] + p["bq"][0]
    k = x @ p["wk"] + p["bk"][0]
    v = x @ p["wv"] + p["bv"][0]

    def split(t):  # (B,S,E) -> (B,H,S,hd)
        return t.reshape(B, S, N_HEAD, HEAD_DIM).transpose(0, 2, 1, 3)

    qh, kh, vh = split(q), split(k), split(v)
    scores = jnp.einsum("bhqd,bhkd->bhqk", qh, kh) / jnp.sqrt(jnp.float32(HEAD_DIM))
    mask = jnp.where(padding[:, None, None, :] > 0.5, -jnp.inf, 0.0)
    scores = scores + mask
    w = jax.nn.softmax(scores, axis=-1)
    ao = jnp.einsum("bhqk,bhkd->bhqd", w, vh).transpose(0, 2, 1, 3).reshape(B, S, E)
    ao = ao @ p["wo"] + p["bo"][0]

    def ln(t, g, b):
        m = jnp.mean(t, -1, keepdims=True)
        var = jnp.mean((t - m) ** 2, -1, keepdims=True)
        return (t - m) * jax.lax.rsqrt(var + LN_EPS) * g[0] + b[0]

    out1 = ln(ao + x, p["g1"], p["be1"])
    h = jnp.maximum(out1 @ p["w1"] + p["bf1"][0], 0.0)
    ff = h @ p["w2"] + p["bf2"][0]
    return ln(out1 + ff, p["g2"], p["be2"])


if __name__ == "__main__":
    key = jax.random.PRNGKey(0)
    k_x, k_p = jax.random.split(key)

    B, S = 8, 8
    x = jax.random.normal(k_x, (B, S, N_EMBD), jnp.float32)
    # key_padding_mask: mask out some trailing key positions in a few batches
    padding = jnp.zeros((B, S), jnp.float32)
    padding = padding.at[1, -2:].set(1.0)
    padding = padding.at[5, -3:].set(1.0)

    params = make_params(k_p)

    out = transformer_block(x, padding, params)
    out = jax.block_until_ready(out)

    ref = reference(x, padding, params)
    assert out.shape == (B, S, N_EMBD)
    # tolerance accounts for bf16 MXU inputs + the EUP approximate reciprocal
    err = float(jnp.max(jnp.abs(out - ref)))
    assert err < 2e-2, err

    print("KERNEL_OK")
</pallas_src>

<mosaic_0001>
module attributes {stable_mosaic.version = 11 : i64} {
  func.func @kernel(%arg0: i32, %arg1: memref<32x64xf32, #tpu.memory_space<vmem>>, %arg2: memref<32x32xf32, #tpu.memory_space<vmem>>, %arg3: memref<64x192xbf16, #tpu.memory_space<vmem>>, %arg4: memref<1x192xf32, #tpu.memory_space<vmem>>, %arg5: memref<64x64xbf16, #tpu.memory_space<vmem>>, %arg6: memref<64x256xbf16, #tpu.memory_space<vmem>>, %arg7: memref<1x256xf32, #tpu.memory_space<vmem>>, %arg8: memref<256x64xbf16, #tpu.memory_space<vmem>>, %arg9: memref<6x64xf32, #tpu.memory_space<vmem>>, %arg10: memref<32x64xf32, #tpu.memory_space<vmem>>, %arg11: memref<32x64xbf16, #tpu.memory_space<vmem>>) attributes {dimension_semantics = [#tpu.dimension_semantics<parallel>], iteration_bounds = array<i64: 2>, scalar_prefetch = 0 : i64, scratch_operands = 1 : i64, tpu.core_type = #tpu.core_type<tc>, window_params = [{transform_indices = @transform_0, window_bounds = array<i64: 32, 64>}, {transform_indices = @transform_1, window_bounds = array<i64: 32, 32>}, {pipeline_mode = #tpu.pipeline_mode<synchronous>, transform_indices = @transform_2, window_bounds = array<i64: 64, 192>}, {pipeline_mode = #tpu.pipeline_mode<synchronous>, transform_indices = @transform_3, window_bounds = array<i64: 1, 192>}, {pipeline_mode = #tpu.pipeline_mode<synchronous>, transform_indices = @transform_4, window_bounds = array<i64: 64, 64>}, {pipeline_mode = #tpu.pipeline_mode<synchronous>, transform_indices = @transform_5, window_bounds = array<i64: 64, 256>}, {pipeline_mode = #tpu.pipeline_mode<synchronous>, transform_indices = @transform_6, window_bounds = array<i64: 1, 256>}, {pipeline_mode = #tpu.pipeline_mode<synchronous>, transform_indices = @transform_7, window_bounds = array<i64: 256, 64>}, {pipeline_mode = #tpu.pipeline_mode<synchronous>, transform_indices = @transform_8, window_bounds = array<i64: 6, 64>}, {transform_indices = @transform_9, window_bounds = array<i64: 32, 64>}]} {
    %c0 = arith.constant 0 : index
    %c0_0 = arith.constant 0 : index
    %0 = vector.load %arg1[%c0, %c0_0] : memref<32x64xf32, #tpu.memory_space<vmem>>, vector<32x64xf32>
    %c0_1 = arith.constant 0 : index
    %c0_2 = arith.constant 0 : index
    %1 = vector.load %arg2[%c0_1, %c0_2] : memref<32x32xf32, #tpu.memory_space<vmem>>, vector<32x32xf32>
    %2 = arith.truncf %0 : vector<32x64xf32> to vector<32x64xbf16>
    %c0_3 = arith.constant 0 : index
    %c0_4 = arith.constant 0 : index
    %3 = vector.load %arg3[%c0_3, %c0_4] : memref<64x192xbf16, #tpu.memory_space<vmem>>, vector<64x192xbf16>
    %cst = arith.constant dense<0.000000e+00> : vector<32x192xf32>
    %4 = tpu.matmul %2, %3, %cst {dimension_numbers = #tpu.dot_dimension_numbers<[1], [0], [0], [1], [0, 0, 1, 1], [], []>} : vector<32x64xbf16>, vector<64x192xbf16>, vector<32x192xf32> -> vector<32x192xf32>
    %c0_5 = arith.constant 0 : index
    %c0_6 = arith.constant 0 : index
    %5 = vector.load %arg4[%c0_5, %c0_6] : memref<1x192xf32, #tpu.memory_space<vmem>>, vector<1x192xf32>
    %6 = vector.broadcast %5 : vector<1x192xf32> to vector<32x192xf32>
    %7 = arith.addf %4, %6 : vector<32x192xf32>
    %c0_7 = arith.constant 0 : index
    %c0_8 = arith.constant 0 : index
    %8 = vector.load %arg9[%c0_7, %c0_8] : memref<6x64xf32, #tpu.memory_space<vmem>>, vector<1x64xf32>
    %c1 = arith.constant 1 : index
    %c0_9 = arith.constant 0 : index
    %9 = vector.load %arg9[%c1, %c0_9] : memref<6x64xf32, #tpu.memory_space<vmem>>, vector<1x64xf32>
    %c2 = arith.constant 2 : index
    %c0_10 = arith.constant 0 : index
    %10 = vector.load %arg9[%c2, %c0_10] : memref<6x64xf32, #tpu.memory_space<vmem>>, vector<1x64xf32>
    %c3 = arith.constant 3 : index
    %c0_11 = arith.constant 0 : index
    %11 = vector.load %arg9[%c3, %c0_11] : memref<6x64xf32, #tpu.memory_space<vmem>>, vector<1x64xf32>
    %c4 = arith.constant 4 : index
    %c0_12 = arith.constant 0 : index
    %12 = vector.load %arg9[%c4, %c0_12] : memref<6x64xf32, #tpu.memory_space<vmem>>, vector<1x64xf32>
    %c5 = arith.constant 5 : index
    %c0_13 = arith.constant 0 : index
    %13 = vector.load %arg9[%c5, %c0_13] : memref<6x64xf32, #tpu.memory_space<vmem>>, vector<1x64xf32>
    %14 = vector.extract_strided_slice %7 {offsets = [0, 0], sizes = [32, 16], strides = [1, 1]} : vector<32x192xf32> to vector<32x16xf32>
    %15 = arith.truncf %14 : vector<32x16xf32> to vector<32x16xbf16>
    %16 = vector.extract_strided_slice %7 {offsets = [0, 64], sizes = [32, 16], strides = [1, 1]} : vector<32x192xf32> to vector<32x16xf32>
    %17 = arith.truncf %16 : vector<32x16xf32> to vector<32x16xbf16>
    %18 = vector.extract_strided_slice %7 {offsets = [0, 128], sizes = [32, 16], strides = [1, 1]} : vector<32x192xf32> to vector<32x16xf32>
    %19 = arith.truncf %18 : vector<32x16xf32> to vector<32x16xbf16>
    %cst_14 = arith.constant dense<0.000000e+00> : vector<32x32xf32>
    %20 = tpu.matmul %15, %17, %cst_14 {dimension_numbers = #tpu.dot_dimension_numbers<[1], [1], [0], [0], [0, 0, 1, 0], [], []>} : vector<32x16xbf16>, vector<32x16xbf16>, vector<32x32xf32> -> vector<32x32xf32>
    %21 = arith.addf %20, %1 : vector<32x32xf32>
    %cst_15 = arith.constant dense<0xFF800000> : vector<32xf32>
    %22 = vector.multi_reduction <maximumf>, %21, %cst_15 [1] : vector<32x32xf32> to vector<32xf32>
    %23 = vector.shape_cast %22 : vector<32xf32> to vector<32x1xf32>
    %24 = vector.broadcast %23 : vector<32x1xf32> to vector<32x32xf32>
    %25 = arith.subf %21, %24 : vector<32x32xf32>
    %26 = math.exp %25 : vector<32x32xf32>
    %cst_16 = arith.constant dense<0.000000e+00> : vector<32xf32>
    %27 = vector.multi_reduction <add>, %26, %cst_16 [1] : vector<32x32xf32> to vector<32xf32>
    %28 = vector.shape_cast %27 : vector<32xf32> to vector<32x1xf32>
    %29 = tpu.reciprocal %28 {approx = true} : vector<32x1xf32> -> vector<32x1xf32>
    %30 = vector.broadcast %29 : vector<32x1xf32> to vector<32x32xf32>
    %31 = arith.mulf %26, %30 : vector<32x32xf32>
    %32 = arith.truncf %31 : vector<32x32xf32> to vector<32x32xbf16>
    %cst_17 = arith.constant dense<0.000000e+00> : vector<32x16xf32>
    %33 = tpu.matmul %32, %19, %cst_17 {dimension_numbers = #tpu.dot_dimension_numbers<[1], [0], [0], [1], [0, 0, 1, 1], [], []>} : vector<32x32xbf16>, vector<32x16xbf16>, vector<32x16xf32> -> vector<32x16xf32>
    %34 = arith.truncf %33 : vector<32x16xf32> to vector<32x16xbf16>
    %c0_18 = arith.constant 0 : index
    %c0_19 = arith.constant 0 : index
    %35 = vector.load %arg11[%c0_18, %c0_19] : memref<32x64xbf16, #tpu.memory_space<vmem>>, vector<32x16xbf16>
    tpu.vector_store %arg11[%c0_18, %c0_19], %34 {strides = array<i32>} : memref<32x64xbf16, #tpu.memory_space<vmem>>, vector<32x16xbf16>,
    %36 = vector.extract_strided_slice %7 {offsets = [0, 16], sizes = [32, 16], strides = [1, 1]} : vector<32x192xf32> to vector<32x16xf32>
    %37 = arith.truncf %36 : vector<32x16xf32> to vector<32x16xbf16>
    %38 = vector.extract_strided_slice %7 {offsets = [0, 80], sizes = [32, 16], strides = [1, 1]} : vector<32x192xf32> to vector<32x16xf32>
    %39 = arith.truncf %38 : vector<32x16xf32> to vector<32x16xbf16>
    %40 = vector.extract_strided_slice %7 {offsets = [0, 144], sizes = [32, 16], strides = [1, 1]} : vector<32x192xf32> to vector<32x16xf32>
    %41 = arith.truncf %40 : vector<32x16xf32> to vector<32x16xbf16>
    %cst_20 = arith.constant dense<0.000000e+00> : vector<32x32xf32>
    %42 = tpu.matmul %37, %39, %cst_20 {dimension_numbers = #tpu.dot_dimension_numbers<[1], [1], [0], [0], [0, 0, 1, 0], [], []>} : vector<32x16xbf16>, vector<32x16xbf16>, vector<32x32xf32> -> vector<32x32xf32>
    %43 = arith.addf %42, %1 : vector<32x32xf32>
    %cst_21 = arith.constant dense<0xFF800000> : vector<32xf32>
    %44 = vector.multi_reduction <maximumf>, %43, %cst_21 [1] : vector<32x32xf32> to vector<32xf32>
    %45 = vector.shape_cast %44 : vector<32xf32> to vector<32x1xf32>
    %46 = vector.broadcast %45 : vector<32x1xf32> to vector<32x32xf32>
    %47 = arith.subf %43, %46 : vector<32x32xf32>
    %48 = math.exp %47 : vector<32x32xf32>
    %cst_22 = arith.constant dense<0.000000e+00> : vector<32xf32>
    %49 = vector.multi_reduction <add>, %48, %cst_22 [1] : vector<32x32xf32> to vector<32xf32>
    %50 = vector.shape_cast %49 : vector<32xf32> to vector<32x1xf32>
    %51 = tpu.reciprocal %50 {approx = true} : vector<32x1xf32> -> vector<32x1xf32>
    %52 = vector.broadcast %51 : vector<32x1xf32> to vector<32x32xf32>
    %53 = arith.mulf %48, %52 : vector<32x32xf32>
    %54 = arith.truncf %53 : vector<32x32xf32> to vector<32x32xbf16>
    %cst_23 = arith.constant dense<0.000000e+00> : vector<32x16xf32>
    %55 = tpu.matmul %54, %41, %cst_23 {dimension_numbers = #tpu.dot_dimension_numbers<[1], [0], [0], [1], [0, 0, 1, 1], [], []>} : vector<32x32xbf16>, vector<32x16xbf16>, vector<32x16xf32> -> vector<32x16xf32>
    %56 = arith.truncf %55 : vector<32x16xf32> to vector<32x16xbf16>
    %c0_24 = arith.constant 0 : index
    %c16 = arith.constant 16 : index
    %57 = vector.load %arg11[%c0_24, %c16] : memref<32x64xbf16, #tpu.memory_space<vmem>>, vector<32x16xbf16>
    tpu.vector_store %arg11[%c0_24, %c16], %56 {strides = array<i32>} : memref<32x64xbf16, #tpu.memory_space<vmem>>, vector<32x16xbf16>,
    %58 = vector.extract_strided_slice %7 {offsets = [0, 32], sizes = [32, 16], strides = [1, 1]} : vector<32x192xf32> to vector<32x16xf32>
    %59 = arith.truncf %58 : vector<32x16xf32> to vector<32x16xbf16>
    %60 = vector.extract_strided_slice %7 {offsets = [0, 96], sizes = [32, 16], strides = [1, 1]} : vector<32x192xf32> to vector<32x16xf32>
    %61 = arith.truncf %60 : vector<32x16xf32> to vector<32x16xbf16>
    %62 = vector.extract_strided_slice %7 {offsets = [0, 160], sizes = [32, 16], strides = [1, 1]} : vector<32x192xf32> to vector<32x16xf32>
    %63 = arith.truncf %62 : vector<32x16xf32> to vector<32x16xbf16>
    %cst_25 = arith.constant dense<0.000000e+00> : vector<32x32xf32>
    %64 = tpu.matmul %59, %61, %cst_25 {dimension_numbers = #tpu.dot_dimension_numbers<[1], [1], [0], [0], [0, 0, 1, 0], [], []>} : vector<32x16xbf16>, vector<32x16xbf16>, vector<32x32xf32> -> vector<32x32xf32>
    %65 = arith.addf %64, %1 : vector<32x32xf32>
    %cst_26 = arith.constant dense<0xFF800000> : vector<32xf32>
    %66 = vector.multi_reduction <maximumf>, %65, %cst_26 [1] : vector<32x32xf32> to vector<32xf32>
    %67 = vector.shape_cast %66 : vector<32xf32> to vector<32x1xf32>
    %68 = vector.broadcast %67 : vector<32x1xf32> to vector<32x32xf32>
    %69 = arith.subf %65, %68 : vector<32x32xf32>
    %70 = math.exp %69 : vector<32x32xf32>
    %cst_27 = arith.constant dense<0.000000e+00> : vector<32xf32>
    %71 = vector.multi_reduction <add>, %70, %cst_27 [1] : vector<32x32xf32> to vector<32xf32>
    %72 = vector.shape_cast %71 : vector<32xf32> to vector<32x1xf32>
    %73 = tpu.reciprocal %72 {approx = true} : vector<32x1xf32> -> vector<32x1xf32>
    %74 = vector.broadcast %73 : vector<32x1xf32> to vector<32x32xf32>
    %75 = arith.mulf %70, %74 : vector<32x32xf32>
    %76 = arith.truncf %75 : vector<32x32xf32> to vector<32x32xbf16>
    %cst_28 = arith.constant dense<0.000000e+00> : vector<32x16xf32>
    %77 = tpu.matmul %76, %63, %cst_28 {dimension_numbers = #tpu.dot_dimension_numbers<[1], [0], [0], [1], [0, 0, 1, 1], [], []>} : vector<32x32xbf16>, vector<32x16xbf16>, vector<32x16xf32> -> vector<32x16xf32>
    %78 = arith.truncf %77 : vector<32x16xf32> to vector<32x16xbf16>
    %c0_29 = arith.constant 0 : index
    %c32 = arith.constant 32 : index
    %79 = vector.load %arg11[%c0_29, %c32] : memref<32x64xbf16, #tpu.memory_space<vmem>>, vector<32x16xbf16>
    tpu.vector_store %arg11[%c0_29, %c32], %78 {strides = array<i32>} : memref<32x64xbf16, #tpu.memory_space<vmem>>, vector<32x16xbf16>,
    %80 = vector.extract_strided_slice %7 {offsets = [0, 48], sizes = [32, 16], strides = [1, 1]} : vector<32x192xf32> to vector<32x16xf32>
    %81 = arith.truncf %80 : vector<32x16xf32> to vector<32x16xbf16>
    %82 = vector.extract_strided_slice %7 {offsets = [0, 112], sizes = [32, 16], strides = [1, 1]} : vector<32x192xf32> to vector<32x16xf32>
    %83 = arith.truncf %82 : vector<32x16xf32> to vector<32x16xbf16>
    %84 = vector.extract_strided_slice %7 {offsets = [0, 176], sizes = [32, 16], strides = [1, 1]} : vector<32x192xf32> to vector<32x16xf32>
    %85 = arith.truncf %84 : vector<32x16xf32> to vector<32x16xbf16>
    %cst_30 = arith.constant dense<0.000000e+00> : vector<32x32xf32>
    %86 = tpu.matmul %81, %83, %cst_30 {dimension_numbers = #tpu.dot_dimension_numbers<[1], [1], [0], [0], [0, 0, 1, 0], [], []>} : vector<32x16xbf16>, vector<32x16xbf16>, vector<32x32xf32> -> vector<32x32xf32>
    %87 = arith.addf %86, %1 : vector<32x32xf32>
    %cst_31 = arith.constant dense<0xFF800000> : vector<32xf32>
    %88 = vector.multi_reduction <maximumf>, %87, %cst_31 [1] : vector<32x32xf32> to vector<32xf32>
    %89 = vector.shape_cast %88 : vector<32xf32> to vector<32x1xf32>
    %90 = vector.broadcast %89 : vector<32x1xf32> to vector<32x32xf32>
    %91 = arith.subf %87, %90 : vector<32x32xf32>
    %92 = math.exp %91 : vector<32x32xf32>
    %cst_32 = arith.constant dense<0.000000e+00> : vector<32xf32>
    %93 = vector.multi_reduction <add>, %92, %cst_32 [1] : vector<32x32xf32> to vector<32xf32>
    %94 = vector.shape_cast %93 : vector<32xf32> to vector<32x1xf32>
    %95 = tpu.reciprocal %94 {approx = true} : vector<32x1xf32> -> vector<32x1xf32>
    %96 = vector.broadcast %95 : vector<32x1xf32> to vector<32x32xf32>
    %97 = arith.mulf %92, %96 : vector<32x32xf32>
    %98 = arith.truncf %97 : vector<32x32xf32> to vector<32x32xbf16>
    %cst_33 = arith.constant dense<0.000000e+00> : vector<32x16xf32>
    %99 = tpu.matmul %98, %85, %cst_33 {dimension_numbers = #tpu.dot_dimension_numbers<[1], [0], [0], [1], [0, 0, 1, 1], [], []>} : vector<32x32xbf16>, vector<32x16xbf16>, vector<32x16xf32> -> vector<32x16xf32>
    %100 = arith.truncf %99 : vector<32x16xf32> to vector<32x16xbf16>
    %c0_34 = arith.constant 0 : index
    %c48 = arith.constant 48 : index
    %101 = vector.load %arg11[%c0_34, %c48] : memref<32x64xbf16, #tpu.memory_space<vmem>>, vector<32x16xbf16>
    tpu.vector_store %arg11[%c0_34, %c48], %100 {strides = array<i32>} : memref<32x64xbf16, #tpu.memory_space<vmem>>, vector<32x16xbf16>,
    %c0_35 = arith.constant 0 : index
    %c0_36 = arith.constant 0 : index
    %102 = vector.load %arg11[%c0_35, %c0_36] : memref<32x64xbf16, #tpu.memory_space<vmem>>, vector<32x64xbf16>
    %c0_37 = arith.constant 0 : index
    %c0_38 = arith.constant 0 : index
    %103 = vector.load %arg5[%c0_37, %c0_38] : memref<64x64xbf16, #tpu.memory_space<vmem>>, vector<64x64xbf16>
    %cst_39 = arith.constant dense<0.000000e+00> : vector<32x64xf32>
    %104 = tpu.matmul %102, %103, %cst_39 {dimension_numbers = #tpu.dot_dimension_numbers<[1], [0], [0], [1], [0, 0, 1, 1], [], []>} : vector<32x64xbf16>, vector<64x64xbf16>, vector<32x64xf32> -> vector<32x64xf32>
    %105 = vector.broadcast %8 : vector<1x64xf32> to vector<32x64xf32>
    %106 = arith.addf %104, %105 : vector<32x64xf32>
    %107 = arith.addf %106, %0 : vector<32x64xf32>
    %cst_40 = arith.constant dense<0.000000e+00> : vector<32xf32>
    %108 = vector.multi_reduction <add>, %107, %cst_40 [1] : vector<32x64xf32> to vector<32xf32>
    %109 = vector.shape_cast %108 : vector<32xf32> to vector<32x1xf32>
    %cst_41 = arith.constant 6.400000e+01 : f32
    %110 = vector.broadcast %cst_41 : f32 to vector<32x1xf32>
    %111 = arith.divf %109, %110 : vector<32x1xf32>
    %112 = vector.broadcast %111 : vector<32x1xf32> to vector<32x64xf32>
    %113 = arith.subf %107, %112 : vector<32x64xf32>
    %114 = arith.mulf %113, %113 : vector<32x64xf32>
    %cst_42 = arith.constant dense<0.000000e+00> : vector<32xf32>
    %115 = vector.multi_reduction <add>, %114, %cst_42 [1] : vector<32x64xf32> to vector<32xf32>
    %116 = vector.shape_cast %115 : vector<32xf32> to vector<32x1xf32>
    %cst_43 = arith.constant 6.400000e+01 : f32
    %117 = vector.broadcast %cst_43 : f32 to vector<32x1xf32>
    %118 = arith.divf %116, %117 : vector<32x1xf32>
    %119 = vector.broadcast %111 : vector<32x1xf32> to vector<32x64xf32>
    %120 = arith.subf %107, %119 : vector<32x64xf32>
    %cst_44 = arith.constant 9.99999974E-6 : f32
    %121 = vector.broadcast %cst_44 : f32 to vector<32x1xf32>
    %122 = arith.addf %118, %121 : vector<32x1xf32>
    %123 = math.rsqrt %122 : vector<32x1xf32>
    %124 = vector.broadcast %123 : vector<32x1xf32> to vector<32x64xf32>
    %125 = arith.mulf %120, %124 : vector<32x64xf32>
    %126 = vector.broadcast %9 : vector<1x64xf32> to vector<32x64xf32>
    %127 = arith.mulf %125, %126 : vector<32x64xf32>
    %128 = vector.broadcast %10 : vector<1x64xf32> to vector<32x64xf32>
    %129 = arith.addf %127, %128 : vector<32x64xf32>
    %130 = arith.truncf %129 : vector<32x64xf32> to vector<32x64xbf16>
    %c0_45 = arith.constant 0 : index
    %c0_46 = arith.constant 0 : index
    %131 = vector.load %arg6[%c0_45, %c0_46] : memref<64x256xbf16, #tpu.memory_space<vmem>>, vector<64x256xbf16>
    %cst_47 = arith.constant dense<0.000000e+00> : vector<32x256xf32>
    %132 = tpu.matmul %130, %131, %cst_47 {dimension_numbers = #tpu.dot_dimension_numbers<[1], [0], [0], [1], [0, 0, 1, 1], [], []>} : vector<32x64xbf16>, vector<64x256xbf16>, vector<32x256xf32> -> vector<32x256xf32>
    %c0_48 = arith.constant 0 : index
    %c0_49 = arith.constant 0 : index
    %133 = vector.load %arg7[%c0_48, %c0_49] : memref<1x256xf32, #tpu.memory_space<vmem>>, vector<1x256xf32>
    %134 = vector.broadcast %133 : vector<1x256xf32> to vector<32x256xf32>
    %135 = arith.addf %132, %134 : vector<32x256xf32>
    %cst_50 = arith.constant 0.000000e+00 : f32
    %136 = vector.broadcast %cst_50 : f32 to vector<32x256xf32>
    %137 = arith.maximumf %135, %136 : vector<32x256xf32>
    %138 = arith.truncf %137 : vector<32x256xf32> to vector<32x256xbf16>
    %c0_51 = arith.constant 0 : index
    %c0_52 = arith.constant 0 : index
    %139 = vector.load %arg8[%c0_51, %c0_52] : memref<256x64xbf16, #tpu.memory_space<vmem>>, vector<256x64xbf16>
    %cst_53 = arith.constant dense<0.000000e+00> : vector<32x64xf32>
    %140 = tpu.matmul %138, %139, %cst_53 {dimension_numbers = #tpu.dot_dimension_numbers<[1], [0], [0], [1], [0, 0, 1, 1], [], []>} : vector<32x256xbf16>, vector<256x64xbf16>, vector<32x64xf32> -> vector<32x64xf32>
    %141 = vector.broadcast %11 : vector<1x64xf32> to vector<32x64xf32>
    %142 = arith.addf %140, %141 : vector<32x64xf32>
    %143 = arith.addf %129, %142 : vector<32x64xf32>
    %cst_54 = arith.constant dense<0.000000e+00> : vector<32xf32>
    %144 = vector.multi_reduction <add>, %143, %cst_54 [1] : vector<32x64xf32> to vector<32xf32>
    %145 = vector.shape_cast %144 : vector<32xf32> to vector<32x1xf32>
    %cst_55 = arith.constant 6.400000e+01 : f32
    %146 = vector.broadcast %cst_55 : f32 to vector<32x1xf32>
    %147 = arith.divf %145, %146 : vector<32x1xf32>
    %148 = vector.broadcast %147 : vector<32x1xf32> to vector<32x64xf32>
    %149 = arith.subf %143, %148 : vector<32x64xf32>
    %150 = arith.mulf %149, %149 : vector<32x64xf32>
    %cst_56 = arith.constant dense<0.000000e+00> : vector<32xf32>
    %151 = vector.multi_reduction <add>, %150, %cst_56 [1] : vector<32x64xf32> to vector<32xf32>
    %152 = vector.shape_cast %151 : vector<32xf32> to vector<32x1xf32>
    %cst_57 = arith.constant 6.400000e+01 : f32
    %153 = vector.broadcast %cst_57 : f32 to vector<32x1xf32>
    %154 = arith.divf %152, %153 : vector<32x1xf32>
    %155 = vector.broadcast %147 : vector<32x1xf32> to vector<32x64xf32>
    %156 = arith.subf %143, %155 : vector<32x64xf32>
    %cst_58 = arith.constant 9.99999974E-6 : f32
    %157 = vector.broadcast %cst_58 : f32 to vector<32x1xf32>
    %158 = arith.addf %154, %157 : vector<32x1xf32>
    %159 = math.rsqrt %158 : vector<32x1xf32>
    %160 = vector.broadcast %159 : vector<32x1xf32> to vector<32x64xf32>
    %161 = arith.mulf %156, %160 : vector<32x64xf32>
    %162 = vector.broadcast %12 : vector<1x64xf32> to vector<32x64xf32>
    %163 = arith.mulf %161, %162 : vector<32x64xf32>
    %164 = vector.broadcast %13 : vector<1x64xf32> to vector<32x64xf32>
    %165 = arith.addf %163, %164 : vector<32x64xf32>
    %c0_59 = arith.constant 0 : index
    %c0_60 = arith.constant 0 : index
    %166 = vector.load %arg10[%c0_59, %c0_60] : memref<32x64xf32, #tpu.memory_space<vmem>>, vector<32x64xf32>
    tpu.vector_store %arg10[%c0_59, %c0_60], %165 {strides = array<i32>} : memref<32x64xf32, #tpu.memory_space<vmem>>, vector<32x64xf32>,
    return
  }
  func.func @transform_0(%arg0: i32) -> (i32, i32) {
    %c0_i32 = arith.constant 0 : i32
    %c0_i32_0 = arith.constant 0 : i32
    return %arg0, %c0_i32 : i32, i32
  }
  func.func @transform_1(%arg0: i32) -> (i32, i32) {
    %c0_i32 = arith.constant 0 : i32
    %c0_i32_0 = arith.constant 0 : i32
    return %arg0, %c0_i32 : i32, i32
  }
  func.func @transform_2(%arg0: i32) -> (i32, i32) {
    %c0_i32 = arith.constant 0 : i32
    %c0_i32_0 = arith.constant 0 : i32
    %c0_i32_1 = arith.constant 0 : i32
    return %c0_i32, %c0_i32_0 : i32, i32
  }
  func.func @transform_3(%arg0: i32) -> (i32, i32) {
    %c0_i32 = arith.constant 0 : i32
    %c0_i32_0 = arith.constant 0 : i32
    %c0_i32_1 = arith.constant 0 : i32
    return %c0_i32, %c0_i32_0 : i32, i32
  }
  func.func @transform_4(%arg0: i32) -> (i32, i32) {
    %c0_i32 = arith.constant 0 : i32
    %c0_i32_0 = arith.constant 0 : i32
    %c0_i32_1 = arith.constant 0 : i32
    return %c0_i32, %c0_i32_0 : i32, i32
  }
  func.func @transform_5(%arg0: i32) -> (i32, i32) {
    %c0_i32 = arith.constant 0 : i32
    %c0_i32_0 = arith.constant 0 : i32
    %c0_i32_1 = arith.constant 0 : i32
    return %c0_i32, %c0_i32_0 : i32, i32
  }
  func.func @transform_6(%arg0: i32) -> (i32, i32) {
    %c0_i32 = arith.constant 0 : i32
    %c0_i32_0 = arith.constant 0 : i32
    %c0_i32_1 = arith.constant 0 : i32
    return %c0_i32, %c0_i32_0 : i32, i32
  }
  func.func @transform_7(%arg0: i32) -> (i32, i32) {
    %c0_i32 = arith.constant 0 : i32
    %c0_i32_0 = arith.constant 0 : i32
    %c0_i32_1 = arith.constant 0 : i32
    return %c0_i32, %c0_i32_0 : i32, i32
  }
  func.func @transform_8(%arg0: i32) -> (i32, i32) {
    %c0_i32 = arith.constant 0 : i32
    %c0_i32_0 = arith.constant 0 : i32
    %c0_i32_1 = arith.constant 0 : i32
    return %c0_i32, %c0_i32_0 : i32, i32
  }
  func.func @transform_9(%arg0: i32) -> (i32, i32) {
    %c0_i32 = arith.constant 0 : i32
    %c0_i32_0 = arith.constant 0 : i32
    return %arg0, %c0_i32 : i32, i32
  }
}

</mosaic_0001>

<llo_original>
// kernel: tpu_custom_call.1
$region0: #{tpu_custom_call.1}
  #allocation0 [shape = 'u32[]', space=smem, size = 0x4, offset = 0x4, fixed_abs, tag = 'smem constant byte address 0x4 - core index']
  #allocation1 [shape = 'u32[72,128]{1,0:T(1,128)}', space=vmem, size = 0x9000, scoped, tag = 'internal scratch']
  #allocation2 [shape = 'bf16[32,64]{1,0:T(8,128)(2,1)}', space=vmem, size = 0x2000, scoped, tag = 'scratch operand']
  %s0 = inlined_call_operand.vmem [shape: f32[64,64], index: 0, kind: input, shape index: {}]
  %s1 = inlined_call_operand.vmem [shape: f32[64,32], index: 1, kind: input, shape index: {}]
  %s2 = inlined_call_operand.vmem [shape: bf16[64,192], index: 2, kind: input, shape index: {}]
  %s3 = inlined_call_operand.vmem [shape: f32[1,192], index: 3, kind: input, shape index: {}]
  %s4 = inlined_call_operand.vmem [shape: bf16[64,64], index: 4, kind: input, shape index: {}]
  %s5 = inlined_call_operand.vmem [shape: bf16[64,256], index: 5, kind: input, shape index: {}]
  %s6 = inlined_call_operand.vmem [shape: f32[1,256], index: 6, kind: input, shape index: {}]
  %s7 = inlined_call_operand.vmem [shape: bf16[256,64], index: 7, kind: input, shape index: {}]
  %s8 = inlined_call_operand.hbm [shape: f32[6,64], index: 8, kind: input, shape index: {}]
  %s9 = inlined_call_operand.hbm [shape: f32[64,64], index: 9, kind: output, shape index: {}]
  %s10 = sld [smem:[#allocation0]]
  $region73: #{tpu_custom_call.1} parent=0
    _
  %s12 = ssub.s32 1, %s10
  %s13 = scalar_select 0, %s12, %s10
  $region1: #{tpu_custom_call.1} parent=0
    #allocation3 [shape = 'u8[4096]{0}', space=vmem, size = 0x1000, scoped, tag = 'input window, operand 8, single buffered']
    #allocation4 [shape = 's32[2]{0}', space=sflag, size = 0x8, scoped, tag = 'scoped memory for tpu_custom_call.1']
    #allocation5 [shape = 's32[2]{0}', space=sflag, size = 0x8, scoped, tag = 'scoped memory for tpu_custom_call.1']
    #allocation6 [shape = 'u8[32768]{0}', space=vmem, size = 0x8000, scoped, tag = 'output window, operand 0']
    %14 = vsyncpa [#allocation4], 0
    %15 = vsyncpa [#allocation5], 0
    %s16 = scalar_lea.sflag [#allocation5], 1
    %17 = vsyncpa %s16, 0
    loop: start=0, step=1, limit=4
    $region2: #{tpu_custom_call.1} parent=1 // loop_pre_header
      _
    $region3: #{tpu_custom_call.1} parent=1 // loop_header
      %s19 = sphi 0, %s23
      %p20 = scmp.ge.s32.totalorder %s19, 4
      %s29 = sphi 0, %s31
      %s32 = sphi 0, %s29
      %s33 = sphi 0, %s32
      %s49 = sphi 0, %s33
      %s55 = sphi 0, %s57
      %s58 = sphi 0, %s55
      %s59 = sphi 0, %s58
      %s75 = sphi 0, %s59
      %s79 = sphi 0, %s79
      %s81 = sphi 0, %s79
      %s82 = sphi 0, %s81
      %s96 = sphi 0, %s82
      %s100 = sphi 0, %s100
      %s102 = sphi 0, %s100
      %s103 = sphi 0, %s102
      %s117 = sphi 0, %s103
      %s121 = sphi 0, %s121
      %s123 = sphi 0, %s121
      %s124 = sphi 0, %s123
      %s138 = sphi 0, %s124
      %s142 = sphi 0, %s142
      %s144 = sphi 0, %s142
      %s145 = sphi 0, %s144
      %s159 = sphi 0, %s145
      %s163 = sphi 0, %s163
      %s165 = sphi 0, %s163
      %s166 = sphi 0, %s165
      %s180 = sphi 0, %s166
      %s184 = sphi 0, %s184
      %s186 = sphi 0, %s184
      %s187 = sphi 0, %s186
      %s201 = sphi 0, %s187
      %s205 = sphi 0, %s205
      %s207 = sphi 0, %s205
      %s208 = sphi 0, %s207
      %s222 = sphi 0, %s208
      %s228 = sphi 0, %s230
      %s231 = sphi 0, %s228
      %s232 = sphi 0, %s231
      %s248 = sphi 0, %s232
    $region4: #{tpu_custom_call.1} parent=1 // loop_header_branch
      %22 = sbr.rel (%p20) target = $region8
    $region5: #{tpu_custom_call.1} parent=1 // loop_body
      %s24 = ssub.s32 %s19, 1
      %s25 = ssub.s32 %s19, 2
      %s26 = sadd.s32 %s19, 1
      %s27 = ssub.s32 %s19, %s26
      %p28 = scmp.eq.s32.totalorder %s27, 0
      %s30 = sadd.s32 %s29, 1
      %s31 = scalar_select %p28, %s29, %s30
      %p34 = pneg %p28
      %p35 = scmp.eq.s32.totalorder %s19, 1
      %p36 = por %p34, %p35
      %p37 = scmp.ne.s32.totalorder %s29, %s32
      %p38 = scmp.eq.s32.totalorder %s19, 0
      %p39 = por %p37, %p38
      %p40 = scmp.ne.s32.totalorder %s29, %s32
      %p41 = scmp.eq.s32.totalorder %s24, 1
      %p42 = por %p40, %p41
      %p43 = scmp.ne.s32.totalorder %s32, %s33
      %p44 = scmp.eq.s32.totalorder %s24, 0
      %p45 = por %p43, %p44
      %p46 = scmp.ne.s32.totalorder %s32, %s33
      %p47 = scmp.eq.s32.totalorder %s25, 1
      %p48 = por %p46, %p47
      %p50 = scmp.ne.s32.totalorder %s33, %s49
      %p51 = scmp.eq.s32.totalorder %s25, 0
      %p52 = por %p50, %p51
      %s53 = ssub.s32 %s19, %s26
      %p54 = scmp.eq.s32.totalorder %s53, 0
      %s56 = sadd.s32 %s55, 1
      %s57 = scalar_select %p54, %s55, %s56
      %p60 = pneg %p54
      %p61 = scmp.eq.s32.totalorder %s19, 1
      %p62 = por %p60, %p61
      %p63 = scmp.ne.s32.totalorder %s55, %s58
      %p64 = scmp.eq.s32.totalorder %s19, 0
      %p65 = por %p63, %p64
      %p66 = scmp.ne.s32.totalorder %s55, %s58
      %p67 = scmp.eq.s32.totalorder %s24, 1
      %p68 = por %p66, %p67
      %p69 = scmp.ne.s32.totalorder %s58, %s59
      %p70 = scmp.eq.s32.totalorder %s24, 0
      %p71 = por %p69, %p70
      %p72 = scmp.ne.s32.totalorder %s58, %s59
      %p73 = scmp.eq.s32.totalorder %s25, 1
      %p74 = por %p72, %p73
      %p76 = scmp.ne.s32.totalorder %s59, %s75
      %p77 = scmp.eq.s32.totalorder %s25, 0
      %p78 = por %p76, %p77
      %s80 = sadd.s32 %s79, 1
      %p83 = scmp.eq.s32.totalorder %s19, 1
      %p84 = scmp.ne.s32.totalorder %s79, %s81
      %p85 = scmp.eq.s32.totalorder %s19, 0
      %p86 = por %p84, %p85
      %p87 = scmp.ne.s32.totalorder %s79, %s81
      %p88 = scmp.eq.s32.totalorder %s24, 1
      %p89 = por %p87, %p88
      %p90 = scmp.ne.s32.totalorder %s81, %s82
      %p91 = scmp.eq.s32.totalorder %s24, 0
      %p92 = por %p90, %p91
      %p93 = scmp.ne.s32.totalorder %s81, %s82
      %p94 = scmp.eq.s32.totalorder %s25, 1
      %p95 = por %p93, %p94
      %p97 = scmp.ne.s32.totalorder %s82, %s96
      %p98 = scmp.eq.s32.totalorder %s25, 0
      %p99 = por %p97, %p98
      %s101 = sadd.s32 %s100, 1
      %p104 = scmp.eq.s32.totalorder %s19, 1
      %p105 = scmp.ne.s32.totalorder %s100, %s102
      %p106 = scmp.eq.s32.totalorder %s19, 0
      %p107 = por %p105, %p106
      %p108 = scmp.ne.s32.totalorder %s100, %s102
      %p109 = scmp.eq.s32.totalorder %s24, 1
      %p110 = por %p108, %p109
      %p111 = scmp.ne.s32.totalorder %s102, %s103
      %p112 = scmp.eq.s32.totalorder %s24, 0
      %p113 = por %p111, %p112
      %p114 = scmp.ne.s32.totalorder %s102, %s103
      %p115 = scmp.eq.s32.totalorder %s25, 1
      %p116 = por %p114, %p115
      %p118 = scmp.ne.s32.totalorder %s103, %s117
      %p119 = scmp.eq.s32.totalorder %s25, 0
      %p120 = por %p118, %p119
      %s122 = sadd.s32 %s121, 1
      %p125 = scmp.eq.s32.totalorder %s19, 1
      %p126 = scmp.ne.s32.totalorder %s121, %s123
      %p127 = scmp.eq.s32.totalorder %s19, 0
      %p128 = por %p126, %p127
      %p129 = scmp.ne.s32.totalorder %s121, %s123
      %p130 = scmp.eq.s32.totalorder %s24, 1
      %p131 = por %p129, %p130
      %p132 = scmp.ne.s32.totalorder %s123, %s124
      %p133 = scmp.eq.s32.totalorder %s24, 0
      %p134 = por %p132, %p133
      %p135 = scmp.ne.s32.totalorder %s123, %s124
      %p136 = scmp.eq.s32.totalorder %s25, 1
      %p137 = por %p135, %p136
      %p139 = scmp.ne.s32.totalorder %s124, %s138
      %p140 = scmp.eq.s32.totalorder %s25, 0
      %p141 = por %p139, %p140
      %s143 = sadd.s32 %s142, 1
      %p146 = scmp.eq.s32.totalorder %s19, 1
      %p147 = scmp.ne.s32.totalorder %s142, %s144
      %p148 = scmp.eq.s32.totalorder %s19, 0
      %p149 = por %p147, %p148
      %p150 = scmp.ne.s32.totalorder %s142, %s144
      %p151 = scmp.eq.s32.totalorder %s24, 1
      %p152 = por %p150, %p151
      %p153 = scmp.ne.s32.totalorder %s144, %s145
      %p154 = scmp.eq.s32.totalorder %s24, 0
      %p155 = por %p153, %p154
      %p156 = scmp.ne.s32.totalorder %s144, %s145
      %p157 = scmp.eq.s32.totalorder %s25, 1
      %p158 = por %p156, %p157
      %p160 = scmp.ne.s32.totalorder %s145, %s159
      %p161 = scmp.eq.s32.totalorder %s25, 0
      %p162 = por %p160, %p161
      %s164 = sadd.s32 %s163, 1
      %p167 = scmp.eq.s32.totalorder %s19, 1
      %p168 = scmp.ne.s32.totalorder %s163, %s165
      %p169 = scmp.eq.s32.totalorder %s19, 0
      %p170 = por %p168, %p169
      %p171 = scmp.ne.s32.totalorder %s163, %s165
      %p172 = scmp.eq.s32.totalorder %s24, 1
      %p173 = por %p171, %p172
      %p174 = scmp.ne.s32.totalorder %s165, %s166
      %p175 = scmp.eq.s32.totalorder %s24, 0
      %p176 = por %p174, %p175
      %p177 = scmp.ne.s32.totalorder %s165, %s166
      %p178 = scmp.eq.s32.totalorder %s25, 1
      %p179 = por %p177, %p178
      %p181 = scmp.ne.s32.totalorder %s166, %s180
      %p182 = scmp.eq.s32.totalorder %s25, 0
      %p183 = por %p181, %p182
      %s185 = sadd.s32 %s184, 1
      %p188 = scmp.eq.s32.totalorder %s19, 1
      %p189 = scmp.ne.s32.totalorder %s184, %s186
      %p190 = scmp.eq.s32.totalorder %s19, 0
      %p191 = por %p189, %p190
      %p192 = scmp.ne.s32.totalorder %s184, %s186
      %p193 = scmp.eq.s32.totalorder %s24, 1
      %p194 = por %p192, %p193
      %p195 = scmp.ne.s32.totalorder %s186, %s187
      %p196 = scmp.eq.s32.totalorder %s24, 0
      %p197 = por %p195, %p196
      %p198 = scmp.ne.s32.totalorder %s186, %s187
      %p199 = scmp.eq.s32.totalorder %s25, 1
      %p200 = por %p198, %p199
      %p202 = scmp.ne.s32.totalorder %s187, %s201
      %p203 = scmp.eq.s32.totalorder %s25, 0
      %p204 = por %p202, %p203
      %s206 = sadd.s32 %s205, 1
      %p209 = scmp.eq.s32.totalorder %s19, 1
      %p210 = scmp.ne.s32.totalorder %s205, %s207
      %p211 = scmp.eq.s32.totalorder %s19, 0
      %p212 = por %p210, %p211
      %p213 = scmp.ne.s32.totalorder %s205, %s207
      %p214 = scmp.eq.s32.totalorder %s24, 1
      %p215 = por %p213, %p214
      %p216 = scmp.ne.s32.totalorder %s207, %s208
      %p217 = scmp.eq.s32.totalorder %s24, 0
      %p218 = por %p216, %p217
      %p219 = scmp.ne.s32.totalorder %s207, %s208
      %p220 = scmp.eq.s32.totalorder %s25, 1
      %p221 = por %p219, %p220
      %p223 = scmp.ne.s32.totalorder %s208, %s222
      %p224 = scmp.eq.s32.totalorder %s25, 0
      %p225 = por %p223, %p224
      %s226 = ssub.s32 %s19, %s26
      %p227 = scmp.eq.s32.totalorder %s226, 0
      %s229 = sadd.s32 %s228, 1
      %s230 = scalar_select %p227, %s228, %s229
      %p233 = pneg %p227
      %p234 = scmp.eq.s32.totalorder %s19, 1
      %p235 = por %p233, %p234
      %p236 = scmp.ne.s32.totalorder %s228, %s231
      %p237 = scmp.eq.s32.totalorder %s19, 0
      %p238 = por %p236, %p237
      %p239 = scmp.ne.s32.totalorder %s228, %s231
      %p240 = scmp.eq.s32.totalorder %s24, 1
      %p241 = por %p239, %p240
      %p242 = scmp.ne.s32.totalorder %s231, %s232
      %p243 = scmp.eq.s32.totalorder %s24, 0
      %p244 = por %p242, %p243
      %p245 = scmp.ne.s32.totalorder %s231, %s232
      %p246 = scmp.eq.s32.totalorder %s25, 1
      %p247 = por %p245, %p246
      %p249 = scmp.ne.s32.totalorder %s232, %s248
      %p250 = scmp.eq.s32.totalorder %s25, 0
      %p251 = por %p249, %p250
      %p252 = scmp.le.s32.totalorder 1, %s19
      %p253 = scmp.lt.s32.totalorder %s19, 3
      %p254 = pnand %p252, %p253
      %p255 = pneg %p254
      // Predicated region
      $region9: #{tpu_custom_call.1} parent=5 // pred_check
        _
      $region10: #{tpu_custom_call.1} parent=5 // pred_check_branch
        %257 = sbr.rel (%p254) target = $region12
      $region11: #{tpu_custom_call.1} parent=5 // pred_region
        %s258 = ssub.s32 %s19, 1
        // Predicated region
        $region13: #{tpu_custom_call.1} parent=11 // pred_check
          %p259 = pneg %p92
        $region14: #{tpu_custom_call.1} parent=11 // pred_check_branch
          %261 = sbr.rel (%p259) target = $region16
        $region15: #{tpu_custom_call.1} parent=11 // pred_region
          _
        $region16: #{tpu_custom_call.1} parent=11 // pred_fallthru
          _
        // Predicated region
        $region17: #{tpu_custom_call.1} parent=11 // pred_check
          %p262 = pneg %p113
        $region18: #{tpu_custom_call.1} parent=11 // pred_check_branch
          %264 = sbr.rel (%p262) target = $region20
        $region19: #{tpu_custom_call.1} parent=11 // pred_region
          _
        $region20: #{tpu_custom_call.1} parent=11 // pred_fallthru
          _
        // Predicated region
        $region21: #{tpu_custom_call.1} parent=11 // pred_check
          %p265 = pneg %p134
        $region22: #{tpu_custom_call.1} parent=11 // pred_check_branch
          %267 = sbr.rel (%p265) target = $region24
        $region23: #{tpu_custom_call.1} parent=11 // pred_region
          _
        $region24: #{tpu_custom_call.1} parent=11 // pred_fallthru
          _
        // Predicated region
        $region25: #{tpu_custom_call.1} parent=11 // pred_check
          %p268 = pneg %p155
        $region26: #{tpu_custom_call.1} parent=11 // pred_check_branch
          %270 = sbr.rel (%p268) target = $region28
        $region27: #{tpu_custom_call.1} parent=11 // pred_region
          _
        $region28: #{tpu_custom_call.1} parent=11 // pred_fallthru
          _
        // Predicated region
        $region29: #{tpu_custom_call.1} parent=11 // pred_check
          %p271 = pneg %p176
        $region30: #{tpu_custom_call.1} parent=11 // pred_check_branch
          %273 = sbr.rel (%p271) target = $region32
        $region31: #{tpu_custom_call.1} parent=11 // pred_region
          _
        $region32: #{tpu_custom_call.1} parent=11 // pred_fallthru
          _
        // Predicated region
        $region33: #{tpu_custom_call.1} parent=11 // pred_check
          %p274 = pneg %p197
        $region34: #{tpu_custom_call.1} parent=11 // pred_check_branch
          %276 = sbr.rel (%p274) target = $region36
        $region35: #{tpu_custom_call.1} parent=11 // pred_region
          _
        $region36: #{tpu_custom_call.1} parent=11 // pred_fallthru
          _
        // Predicated region
        $region37: #{tpu_custom_call.1} parent=11 // pred_check
          %p277 = pneg %p218
        $region38: #{tpu_custom_call.1} parent=11 // pred_check_branch
          %279 = sbr.rel (%p277) target = $region40
        $region39: #{tpu_custom_call.1} parent=11 // pred_region
          %281 = vsyncadd [#allocation4], 0
          %s283 = sshll.u32 %s8, 4
          %s284 = int_to_ptr.hbm [resolvable:$true] %s283
          %s285 = sshll.u32 [#allocation3], 4
          %s286 = int_to_ptr.vmem [resolvable:$true] %s285
          %288 = dma.hbm_to_vmem [thread:$0]  %s284, 128, %s286, [#allocation4]
        $region40: #{tpu_custom_call.1} parent=11 // pred_fallthru
          _
      $region12: #{tpu_custom_call.1} parent=5 // pred_fallthru
        _
      %p289 = scmp.lt.s32.totalorder %s19, 2
      // Predicated region
      $region41: #{tpu_custom_call.1} parent=5 // pred_check
        %p290 = pneg %p289
      $region42: #{tpu_custom_call.1} parent=5 // pred_check_branch
        %292 = sbr.rel (%p290) target = $region44
      $region43: #{tpu_custom_call.1} parent=5 // pred_region
        // Predicated region
        $region45: #{tpu_custom_call.1} parent=43 // pred_check
          %p293 = pneg %p39
        $region46: #{tpu_custom_call.1} parent=43 // pred_check_branch
          %295 = sbr.rel (%p293) target = $region48
        $region47: #{tpu_custom_call.1} parent=43 // pred_region
          %s296 = smul.u32 4, %s19
          %p297 = scmp.lt.s32.totalorder %s296, 7
          %s298 = scalar_select %p297, %s296, 7
          %s299 = smul.addr %s298, 8
          %s300 = scalar_lea.vmem %s0, %s299
          %s301 = smul.u32 4, %s19
        $region48: #{tpu_custom_call.1} parent=43 // pred_fallthru
          _
        // Predicated region
        $region49: #{tpu_custom_call.1} parent=43 // pred_check
          %p302 = pneg %p65
        $region50: #{tpu_custom_call.1} parent=43 // pred_check_branch
          %304 = sbr.rel (%p302) target = $region52
        $region51: #{tpu_custom_call.1} parent=43 // pred_region
          %s305 = smul.u32 4, %s19
          %p306 = scmp.lt.s32.totalorder %s305, 7
          %s307 = scalar_select %p306, %s305, 7
          %s308 = smul.addr %s307, 8
          %s309 = scalar_lea.vmem %s1, %s308
          %s310 = smul.u32 4, %s19
        $region52: #{tpu_custom_call.1} parent=43 // pred_fallthru
          _
      $region44: #{tpu_custom_call.1} parent=5 // pred_fallthru
        _
      %p311 = scmp.le.s32.totalorder 1, %s19
      %p312 = scmp.lt.s32.totalorder %s19, 3
      %p313 = pnand %p311, %p312
      %p314 = pneg %p313
      // Predicated region
      $region53: #{tpu_custom_call.1} parent=5 // pred_check
        _
      $region54: #{tpu_custom_call.1} parent=5 // pred_check_branch
        %316 = sbr.rel (%p313) target = $region56
      $region55: #{tpu_custom_call.1} parent=5 // pred_region
        %s317 = ssub.s32 %s19, 1
        // Predicated region
        $region57: #{tpu_custom_call.1} parent=55 // pred_check
          %p318 = pneg %p218
        $region58: #{tpu_custom_call.1} parent=55 // pred_check_branch
          %320 = sbr.rel (%p318) target = $region60
        $region59: #{tpu_custom_call.1} parent=55 // pred_region
          %322 = dma.done [#allocation4], 128
        $region60: #{tpu_custom_call.1} parent=55 // pred_fallthru
          _
        %s323 = smul.u32 4, %s24
        %p324 = scmp.lt.s32.totalorder %s323, 7
        %s325 = scalar_select %p324, %s323, 7
        %s326 = smul.addr %s325, 8
        %s327 = scalar_lea.vmem %s0, %s326
        %p328 = pneg %p45
        %p329 = pneg %p42
        %s330 = smul.u32 4, %s24
        %p331 = scmp.lt.s32.totalorder %s330, 7
        %s332 = scalar_select %p331, %s330, 7
        %s333 = smul.addr %s332, 8
        %s334 = scalar_lea.vmem %s1, %s333
        %p335 = pneg %p71
        %p336 = pneg %p68
        %p337 = pneg %p92
        %p338 = pneg %p89
        %p339 = pneg %p113
        %p340 = pneg %p110
        %p341 = pneg %p134
        %p342 = pneg %p131
        %p343 = pneg %p155
        %p344 = pneg %p152
        %p345 = pneg %p176
        %p346 = pneg %p173
        %p347 = pneg %p197
        %p348 = pneg %p194
        %p349 = pneg %p218
        %p350 = pneg %p215
        %p351 = pneg %p244
        %p352 = pneg %p241
        %s353 = sand.u32 %s231, 1
        %s354 = scalar_lea.sflag [#allocation5], %s353
        %s355 = sand.u32 %s231, 1
        %s356 = smul.addr %s355, 32
        %s357 = scalar_lea.vmem [#allocation6], %s356
        %s358 = smul.u32 4, %s24
        %p359 = scmp.lt.s32.totalorder %s358, 7
        %s360 = scalar_select %p359, %s358, 7
        %s361 = smul.addr %s360, 8
        %s362 = scalar_lea.vmem %s0, %s361
        %s363 = smul.u32 4, %s24
        %s364 = smul.u32 4, %s24
        %p365 = scmp.lt.s32.totalorder %s364, 7
        %s366 = scalar_select %p365, %s364, 7
        %s367 = smul.addr %s366, 8
        %s368 = scalar_lea.vmem %s1, %s367
        %s369 = smul.u32 4, %s24
        %s370 = smul.u32 4, %s24
        %v372 = vld [vmem:[%s362] sm:$0xff]
        %v373 = vld [vmem:[%s362 + $0x8] sm:$0xff]
        %v374 = vld [vmem:[%s362 + $0x10] sm:$0xff]
        %v375 = vld [vmem:[%s362 + $0x18] sm:$0xff]
        %v376 = vld [vmem:[%s368] sm:$0xff]
        %v377 = vld [vmem:[%s368 + $0x8] sm:$0xff]
        %v378 = vld [vmem:[%s368 + $0x10] sm:$0xff]
        %v379 = vld [vmem:[%s368 + $0x18] sm:$0xff]
        %v380 = vpack.c.bf16 %v373, %v372
        %v381 = vpack.c.bf16 %v375, %v374
        %v382 = vld [vmem:[%s2] sm:$0xff]
        %v383 = vld [vmem:[%s2 + $0x8] sm:$0xff]
        %v384 = vld [vmem:[%s2 + $0x10] sm:$0xff]
        %v385 = vld [vmem:[%s2 + $0x18] sm:$0xff]
        %v386 = vld [vmem:[%s2 + $0x20] sm:$0xff]
        %v387 = vld [vmem:[%s2 + $0x28] sm:$0xff]
        %v388 = vld [vmem:[%s2 + $0x30] sm:$0xff]
        %v389 = vld [vmem:[%s2 + $0x38] sm:$0xff]
        %v390 = vld [vmem:[%s3] sm:$0x3]
        %v392 = vperm.slane %v390, 0
        %v393 = vperm.slane %v390, 1
        %v404 = vunpack.c.l.b16 %v382
        %v405 = vunpack.c.h.b16 %v382
        %v406 = vunpack.c.l.b16 %v383
        %v407 = vunpack.c.h.b16 %v383
        %v408 = vunpack.c.l.b16 %v384
        %v409 = vunpack.c.h.b16 %v384
        %v410 = vunpack.c.l.b16 %v385
        %v411 = vunpack.c.h.b16 %v385
        %v412 = vunpack.c.l.b16 %v386
        %v413 = vunpack.c.h.b16 %v386
        %v414 = vunpack.c.l.b16 %v387
        %v415 = vunpack.c.h.b16 %v387
        %v416 = vunpack.c.l.b16 %v388
        %v417 = vunpack.c.h.b16 %v388
        %v418 = vunpack.c.l.b16 %v389
        %v419 = vunpack.c.h.b16 %v389
        %v420 = vpack.c.b16 %v406, %v404
        %v421 = vpack.c.b16 %v407, %v405
        %v422 = vpack.c.b16 %v410, %v408
        %v423 = vpack.c.b16 %v411, %v409
        %v424 = vpack.c.b16 %v414, %v412
        %v425 = vpack.c.b16 %v415, %v413
        %v426 = vpack.c.b16 %v418, %v416
        %v427 = vpack.c.b16 %v419, %v417
        %vm436 = vcmask 523264
        %v438 = vsel %vm436, %v380, 0
        %v441 = vsel %vm436, %v381, 0
        %443 = vmatpush.bf16.msra.mxu0 0
        %444 = vmatpush.bf16.msra.mxu0 0
        %445 = vmatpush.bf16.msra.mxu0 0
        %446 = vmatpush.bf16.msra.mxu0 0
        %447 = vmatpush.bf16.msra.mxu0 %v426
        %448 = vmatpush.bf16.msra.mxu0 %v424
        %449 = vmatpush.bf16.msra.mxu0 %v422
        %450 = vmatpush.bf16.msra.mxu0 %v420
        %451 = vmatmul.bf16.gmra.mxu0 %v438
        %v452 = vpop.f32.mrf.mxu0
        %v453 = vadd.f32 %v392, %v452
        %v454 = vpop.f32.mrf.mxu0
        %v455 = vadd.f32 %v392, %v454
        %456 = vmatmul.bf16.gmra.mxu0 %v441
        %v457 = vpop.f32.mrf.mxu0
        %v458 = vadd.f32 %v392, %v457
        %v459 = vpop.f32.mrf.mxu0
        %v460 = vadd.f32 %v392, %v459
        %461 = vdwg.mxu0
        %462 = vmatpush.bf16.msra.mxu0 0
        %463 = vmatpush.bf16.msra.mxu0 0
        %464 = vmatpush.bf16.msra.mxu0 0
        %465 = vmatpush.bf16.msra.mxu0 0
        %466 = vmatpush.bf16.msra.mxu0 %v427
        %467 = vmatpush.bf16.msra.mxu0 %v425
        %468 = vmatpush.bf16.msra.mxu0 %v423
        %469 = vmatpush.bf16.msra.mxu0 %v421
        %470 = vmatmul.bf16.gmra.mxu0 %v438
        %v471 = vpop.f32.mrf.mxu0
        %v472 = vadd.f32 %v393, %v471
        %v473 = vpop.f32.mrf.mxu0
        %v474 = vadd.f32 %v393, %v473
        %475 = vmatmul.bf16.gmra.mxu0 %v441
        %v476 = vpop.f32.mrf.mxu0
        %v477 = vadd.f32 %v393, %v476
        %v478 = vpop.f32.mrf.mxu0
        %v479 = vadd.f32 %v393, %v478
        %480 = vdwg.mxu0
        %v481 = vld [vmem:[#allocation3] sm:$0x1]
        %v482 = vld [vmem:[#allocation3 + $0x1] sm:$0x1]
        %v483 = vld [vmem:[#allocation3 + $0x2] sm:$0x1]
        %v484 = vld [vmem:[#allocation3 + $0x3] sm:$0x1]
        %v485 = vld [vmem:[#allocation3 + $0x4] sm:$0x1]
        %v486 = vld [vmem:[#allocation3 + $0x5] sm:$0x1]
        %v487 = vpack.c.bf16 %v455, %v453
        %v488 = vpack.c.bf16 %v460, %v458
        %v489 = vpack.c.bf16 %v474, %v472
        %v490 = vpack.c.bf16 %v479, %v477
        %493 = vrot.lane.b32.xlu0 %v487, 64
        %v494 = vpop.permute.xlu0 %493
        %495 = vrot.lane.b32.xlu0 %v488, 64
        %v496 = vpop.permute.xlu0 %495
        %vm497 = vcmask 130048
        %v499 = vsel %vm497, %v487, 0
        %v502 = vsel %vm497, %v488, 0
        %v505 = vsel %vm497, %v494, 0
        %v508 = vsel %vm497, %v496, 0
        %510 = vmatpush.bf16.xpose.msra.mxu0 0
        %511 = vmatpush.bf16.xpose.msra.mxu0 0
        %512 = vmatpush.bf16.xpose.msra.mxu0 0
        %513 = vmatpush.bf16.xpose.msra.mxu0 0
        %514 = vmatpush.bf16.xpose.msra.mxu0 0
        %515 = vmatpush.bf16.xpose.msra.mxu0 0
        %516 = vmatpush.bf16.xpose.msra.mxu0 %v508
        %517 = vmatpush.bf16.xpose.msra.mxu0 %v505
        %518 = vmatmul.bf16.gmra.mxu0 %v499
        %v519 = vpop.f32.mrf.mxu0
        %v520 = vadd.f32 %v376, %v519
        %v521 = vpop.f32.mrf.mxu0
        %v522 = vadd.f32 %v377, %v521
        %523 = vmatmul.bf16.gmra.mxu0 %v502
        %v524 = vpop.f32.mrf.mxu0
        %v525 = vadd.f32 %v378, %v524
        %v526 = vpop.f32.mrf.mxu0
        %v527 = vadd.f32 %v379, %v526
        %528 = vdwg.mxu0
        %vm529 = vcmask 261120
        %v530 = vsel %vm529, %v520, -inf
        %531 = vmax.xlane.f32.xlu0 %v530
        %v532 = vpop.xlane.xlu0 %531
        %v533 = vsel %vm529, %v522, -inf
        %534 = vmax.xlane.f32.xlu0 %v533
        %v535 = vpop.xlane.xlu0 %534
        %v536 = vsel %vm529, %v525, -inf
        %537 = vmax.xlane.f32.xlu0 %v536
        %v538 = vpop.xlane.xlu0 %537
        %v539 = vsel %vm529, %v527, -inf
        %540 = vmax.xlane.f32.xlu0 %v539
        %v541 = vpop.xlane.xlu0 %540
        %v542 = vsub.f32 %v520, %v532
        %v543 = vsub.f32 %v522, %v535
        %v544 = vsub.f32 %v525, %v538
        %v545 = vsub.f32 %v527, %v541
        %v546 = vmul.f32 %v542, 1.442695
        %v547 = vpow.pop %v546
        %v548 = vmul.f32 %v543, 1.442695
        %v549 = vpow.pop %v548
        %v550 = vmul.f32 %v544, 1.442695
        %v551 = vpow.pop %v550
        %v552 = vmul.f32 %v545, 1.442695
        %v553 = vpow.pop %v552
        %v554 = vsel %vm529, %v547, 0.0
        %555 = vadd.xlane.f32.xlu0 %v554
        %v556 = vpop.xlane.xlu0 %555
        %v557 = vsel %vm529, %v549, 0.0
        %558 = vadd.xlane.f32.xlu0 %v557
        %v559 = vpop.xlane.xlu0 %558
        %v560 = vsel %vm529, %v551, 0.0
        %561 = vadd.xlane.f32.xlu0 %v560
        %v562 = vpop.xlane.xlu0 %561
        %v563 = vsel %vm529, %v553, 0.0
        %564 = vadd.xlane.f32.xlu0 %v563
        %v565 = vpop.xlane.xlu0 %564
        %v566 = vrcp.pop %v556
        %v567 = vrcp.pop %v559
        %v568 = vrcp.pop %v562
        %v569 = vrcp.pop %v565
        %v570 = vmul.f32 %v547, %v566
        %v571 = vmul.f32 %v549, %v567
        %v572 = vmul.f32 %v551, %v568
        %v573 = vmul.f32 %v553, %v569
        %v574 = vpack.c.bf16 %v571, %v570
        %v575 = vpack.c.bf16 %v573, %v572
        %v577 = vsel %vm529, %v574, 0
        %v580 = vsel %vm529, %v575, 0
        %582 = vmatpush.bf16.msra.mxu0 0
        %583 = vmatpush.bf16.msra.mxu0 0
        %584 = vmatpush.bf16.msra.mxu0 0
        %585 = vmatpush.bf16.msra.mxu0 0
        %586 = vmatpush.bf16.msra.mxu0 0
        %587 = vmatpush.bf16.msra.mxu0 0
        %588 = vmatpush.bf16.msra.mxu0 %v490
        %589 = vmatpush.bf16.msra.mxu0 %v489
        %590 = vmatmul.bf16.gmra.mxu0 %v577
        %v591 = vpop.f32.mrf.mxu0
        %v592 = vadd.f32 0.0, %v591
        %v593 = vpop.f32.mrf.mxu0
        %v594 = vadd.f32 0.0, %v593
        %595 = vmatmul.bf16.gmra.mxu0 %v580
        %v596 = vpop.f32.mrf.mxu0
        %v597 = vadd.f32 0.0, %v596
        %v598 = vpop.f32.mrf.mxu0
        %v599 = vadd.f32 0.0, %v598
        %600 = vdwg.mxu0
        %v601 = vpack.c.bf16 %v592, %v592
        %v602 = vpack.c.bf16 %v594, %v594
        %v603 = vpack.c.bf16 %v597, %v597
        %v604 = vpack.c.bf16 %v599, %v599
        %vm605 = vcmask 125952
        %606 = vst.msk [vmem:[#allocation2] sm:$0xf] %vm605, %v601
        %607 = vst.msk [vmem:[#allocation2 + $0x4] sm:$0xf] %vm605, %v602
        %608 = vst.msk [vmem:[#allocation2 + $0x8] sm:$0xf] %vm605, %v603
        %609 = vst.msk [vmem:[#allocation2 + $0xc] sm:$0xf] %vm605, %v604
        %610 = vrot.lane.b32.xlu0 %v487, 112
        %v611 = vpop.permute.xlu0 %610
        %612 = vrot.lane.b32.xlu0 %v488, 112
        %v613 = vpop.permute.xlu0 %612
        %614 = vrot.lane.b32.xlu0 %v487, 48
        %v615 = vpop.permute.xlu0 %614
        %616 = vrot.lane.b32.xlu0 %v488, 48
        %v617 = vpop.permute.xlu0 %616
        %v619 = vsel %vm497, %v611, 0
        %v622 = vsel %vm497, %v613, 0
        %v625 = vsel %vm497, %v615, 0
        %v628 = vsel %vm497, %v617, 0
        %630 = vmatpush.bf16.xpose.msra.mxu0 0
        %631 = vmatpush.bf16.xpose.msra.mxu0 0
        %632 = vmatpush.bf16.xpose.msra.mxu0 0
        %633 = vmatpush.bf16.xpose.msra.mxu0 0
        %634 = vmatpush.bf16.xpose.msra.mxu0 0
        %635 = vmatpush.bf16.xpose.msra.mxu0 0
        %636 = vmatpush.bf16.xpose.msra.mxu0 %v628
        %637 = vmatpush.bf16.xpose.msra.mxu0 %v625
        %638 = vmatmul.bf16.gmra.mxu0 %v619
        %v639 = vpop.f32.mrf.mxu0
        %v640 = vadd.f32 %v376, %v639
        %v641 = vpop.f32.mrf.mxu0
        %v642 = vadd.f32 %v377, %v641
        %643 = vmatmul.bf16.gmra.mxu0 %v622
        %v644 = vpop.f32.mrf.mxu0
        %v645 = vadd.f32 %v378, %v644
        %v646 = vpop.f32.mrf.mxu0
        %v647 = vadd.f32 %v379, %v646
        %648 = vdwg.mxu0
        %v649 = vsel %vm529, %v640, -inf
        %650 = vmax.xlane.f32.xlu0 %v649
        %v651 = vpop.xlane.xlu0 %650
        %v652 = vsel %vm529, %v642, -inf
        %653 = vmax.xlane.f32.xlu0 %v652
        %v654 = vpop.xlane.xlu0 %653
        %v655 = vsel %vm529, %v645, -inf
        %656 = vmax.xlane.f32.xlu0 %v655
        %v657 = vpop.xlane.xlu0 %656
        %v658 = vsel %vm529, %v647, -inf
        %659 = vmax.xlane.f32.xlu0 %v658
        %v660 = vpop.xlane.xlu0 %659
        %v661 = vsub.f32 %v640, %v651
        %v662 = vsub.f32 %v642, %v654
        %v663 = vsub.f32 %v645, %v657
        %v664 = vsub.f32 %v647, %v660
        %v665 = vmul.f32 %v661, 1.442695
        %v666 = vpow.pop %v665
        %v667 = vmul.f32 %v662, 1.442695
        %v668 = vpow.pop %v667
        %v669 = vmul.f32 %v663, 1.442695
        %v670 = vpow.pop %v669
        %v671 = vmul.f32 %v664, 1.442695
        %v672 = vpow.pop %v671
        %v673 = vsel %vm529, %v666, 0.0
        %674 = vadd.xlane.f32.xlu0 %v673
        %v675 = vpop.xlane.xlu0 %674
        %v676 = vsel %vm529, %v668, 0.0
        %677 = vadd.xlane.f32.xlu0 %v676
        %v678 = vpop.xlane.xlu0 %677
        %v679 = vsel %vm529, %v670, 0.0
        %680 = vadd.xlane.f32.xlu0 %v679
        %v681 = vpop.xlane.xlu0 %680
        %v682 = vsel %vm529, %v672, 0.0
        %683 = vadd.xlane.f32.xlu0 %v682
        %v684 = vpop.xlane.xlu0 %683
        %v685 = vrcp.pop %v675
        %v686 = vrcp.pop %v678
        %v687 = vrcp.pop %v681
        %v688 = vrcp.pop %v684
        %v689 = vmul.f32 %v666, %v685
        %v690 = vmul.f32 %v668, %v686
        %v691 = vmul.f32 %v670, %v687
        %v692 = vmul.f32 %v672, %v688
        %v693 = vpack.c.bf16 %v690, %v689
        %v694 = vpack.c.bf16 %v692, %v691
        %697 = vrot.lane.b32.xlu0 %v489, 112
        %v698 = vpop.permute.xlu0 %697
        %699 = vrot.lane.b32.xlu0 %v490, 112
        %v700 = vpop.permute.xlu0 %699
        %v704 = vsel %vm529, %v693, 0
        %v707 = vsel %vm529, %v694, 0
        %709 = vmatpush.bf16.msra.mxu0 0
        %710 = vmatpush.bf16.msra.mxu0 0
        %711 = vmatpush.bf16.msra.mxu0 0
        %712 = vmatpush.bf16.msra.mxu0 0
        %713 = vmatpush.bf16.msra.mxu0 0
        %714 = vmatpush.bf16.msra.mxu0 0
        %715 = vmatpush.bf16.msra.mxu0 %v700
        %716 = vmatpush.bf16.msra.mxu0 %v698
        %717 = vmatmul.bf16.gmra.mxu0 %v704
        %v718 = vpop.f32.mrf.mxu0
        %v719 = vadd.f32 0.0, %v718
        %v720 = vpop.f32.mrf.mxu0
        %v721 = vadd.f32 0.0, %v720
        %722 = vmatmul.bf16.gmra.mxu0 %v707
        %v723 = vpop.f32.mrf.mxu0
        %v724 = vadd.f32 0.0, %v723
        %v725 = vpop.f32.mrf.mxu0
        %v726 = vadd.f32 0.0, %v725
        %727 = vdwg.mxu0
        %v728 = vpack.c.bf16 %v719, %v719
        %v729 = vpack.c.bf16 %v721, %v721
        %v730 = vpack.c.bf16 %v724, %v724
        %v731 = vpack.c.bf16 %v726, %v726
        %736 = vrot.lane.b32.xlu0 %v728, 16
        %v737 = vpop.permute.xlu0 %736
        %738 = vrot.lane.b32.xlu0 %v729, 16
        %v739 = vpop.permute.xlu0 %738
        %740 = vrot.lane.b32.xlu0 %v730, 16
        %v741 = vpop.permute.xlu0 %740
        %742 = vrot.lane.b32.xlu0 %v731, 16
        %v743 = vpop.permute.xlu0 %742
        %vm748 = vcmask 257152
        %749 = vst.msk [vmem:[#allocation2] sm:$0xf] %vm748, %v737
        %750 = vst.msk [vmem:[#allocation2 + $0x4] sm:$0xf] %vm748, %v739
        %751 = vst.msk [vmem:[#allocation2 + $0x8] sm:$0xf] %vm748, %v741
        %752 = vst.msk [vmem:[#allocation2 + $0xc] sm:$0xf] %vm748, %v743
        %753 = vrot.lane.b32.xlu0 %v487, 96
        %v754 = vpop.permute.xlu0 %753
        %755 = vrot.lane.b32.xlu0 %v488, 96
        %v756 = vpop.permute.xlu0 %755
        %757 = vrot.lane.b32.xlu0 %v487, 32
        %v758 = vpop.permute.xlu0 %757
        %759 = vrot.lane.b32.xlu0 %v488, 32
        %v760 = vpop.permute.xlu0 %759
        %v762 = vsel %vm497, %v754, 0
        %v765 = vsel %vm497, %v756, 0
        %v768 = vsel %vm497, %v758, 0
        %v771 = vsel %vm497, %v760, 0
        %773 = vmatpush.bf16.xpose.msra.mxu0 0
        %774 = vmatpush.bf16.xpose.msra.mxu0 0
        %775 = vmatpush.bf16.xpose.msra.mxu0 0
        %776 = vmatpush.bf16.xpose.msra.mxu0 0
        %777 = vmatpush.bf16.xpose.msra.mxu0 0
        %778 = vmatpush.bf16.xpose.msra.mxu0 0
        %779 = vmatpush.bf16.xpose.msra.mxu0 %v771
        %780 = vmatpush.bf16.xpose.msra.mxu0 %v768
        %781 = vmatmul.bf16.gmra.mxu0 %v762
        %v782 = vpop.f32.mrf.mxu0
        %v783 = vadd.f32 %v376, %v782
        %v784 = vpop.f32.mrf.mxu0
        %v785 = vadd.f32 %v377, %v784
        %786 = vmatmul.bf16.gmra.mxu0 %v765
        %v787 = vpop.f32.mrf.mxu0
        %v788 = vadd.f32 %v378, %v787
        %v789 = vpop.f32.mrf.mxu0
        %v790 = vadd.f32 %v379, %v789
        %791 = vdwg.mxu0
        %v792 = vsel %vm529, %v783, -inf
        %793 = vmax.xlane.f32.xlu0 %v792
        %v794 = vpop.xlane.xlu0 %793
        %v795 = vsel %vm529, %v785, -inf
        %796 = vmax.xlane.f32.xlu0 %v795
        %v797 = vpop.xlane.xlu0 %796
        %v798 = vsel %vm529, %v788, -inf
        %799 = vmax.xlane.f32.xlu0 %v798
        %v800 = vpop.xlane.xlu0 %799
        %v801 = vsel %vm529, %v790, -inf
        %802 = vmax.xlane.f32.xlu0 %v801
        %v803 = vpop.xlane.xlu0 %802
        %v804 = vsub.f32 %v783, %v794
        %v805 = vsub.f32 %v785, %v797
        %v806 = vsub.f32 %v788, %v800
        %v807 = vsub.f32 %v790, %v803
        %v808 = vmul.f32 %v804, 1.442695
        %v809 = vpow.pop %v808
        %v810 = vmul.f32 %v805, 1.442695
        %v811 = vpow.pop %v810
        %v812 = vmul.f32 %v806, 1.442695
        %v813 = vpow.pop %v812
        %v814 = vmul.f32 %v807, 1.442695
        %v815 = vpow.pop %v814
        %v816 = vsel %vm529, %v809, 0.0
        %817 = vadd.xlane.f32.xlu0 %v816
        %v818 = vpop.xlane.xlu0 %817
        %v819 = vsel %vm529, %v811, 0.0
        %820 = vadd.xlane.f32.xlu0 %v819
        %v821 = vpop.xlane.xlu0 %820
        %v822 = vsel %vm529, %v813, 0.0
        %823 = vadd.xlane.f32.xlu0 %v822
        %v824 = vpop.xlane.xlu0 %823
        %v825 = vsel %vm529, %v815, 0.0
        %826 = vadd.xlane.f32.xlu0 %v825
        %v827 = vpop.xlane.xlu0 %826
        %v828 = vrcp.pop %v818
        %v829 = vrcp.pop %v821
        %v830 = vrcp.pop %v824
        %v831 = vrcp.pop %v827
        %v832 = vmul.f32 %v809, %v828
        %v833 = vmul.f32 %v811, %v829
        %v834 = vmul.f32 %v813, %v830
        %v835 = vmul.f32 %v815, %v831
        %v836 = vpack.c.bf16 %v833, %v832
        %v837 = vpack.c.bf16 %v835, %v834
        %838 = vrot.lane.b32.xlu0 %v489, 96
        %v839 = vpop.permute.xlu0 %838
        %840 = vrot.lane.b32.xlu0 %v490, 96
        %v841 = vpop.permute.xlu0 %840
        %v845 = vsel %vm529, %v836, 0
        %v848 = vsel %vm529, %v837, 0
        %850 = vmatpush.bf16.msra.mxu0 0
        %851 = vmatpush.bf16.msra.mxu0 0
        %852 = vmatpush.bf16.msra.mxu0 0
        %853 = vmatpush.bf16.msra.mxu0 0
        %854 = vmatpush.bf16.msra.mxu0 0
        %855 = vmatpush.bf16.msra.mxu0 0
        %856 = vmatpush.bf16.msra.mxu0 %v841
        %857 = vmatpush.bf16.msra.mxu0 %v839
        %858 = vmatmul.bf16.gmra.mxu0 %v845
        %v859 = vpop.f32.mrf.mxu0
        %v860 = vadd.f32 0.0, %v859
        %v861 = vpop.f32.mrf.mxu0
        %v862 = vadd.f32 0.0, %v861
        %863 = vmatmul.bf16.gmra.mxu0 %v848
        %v864 = vpop.f32.mrf.mxu0
        %v865 = vadd.f32 0.0, %v864
        %v866 = vpop.f32.mrf.mxu0
        %v867 = vadd.f32 0.0, %v866
        %868 = vdwg.mxu0
        %v869 = vpack.c.bf16 %v860, %v860
        %v870 = vpack.c.bf16 %v862, %v862
        %v871 = vpack.c.bf16 %v865, %v865
        %v872 = vpack.c.bf16 %v867, %v867
        %877 = vrot.lane.b32.xlu0 %v869, 32
        %v878 = vpop.permute.xlu0 %877
        %879 = vrot.lane.b32.xlu0 %v870, 32
        %v880 = vpop.permute.xlu0 %879
        %881 = vrot.lane.b32.xlu0 %v871, 32
        %v882 = vpop.permute.xlu0 %881
        %883 = vrot.lane.b32.xlu0 %v872, 32
        %v884 = vpop.permute.xlu0 %883
        %vm889 = vcmask 388352
        %890 = vst.msk [vmem:[#allocation2] sm:$0xf] %vm889, %v878
        %891 = vst.msk [vmem:[#allocation2 + $0x4] sm:$0xf] %vm889, %v880
        %892 = vst.msk [vmem:[#allocation2 + $0x8] sm:$0xf] %vm889, %v882
        %893 = vst.msk [vmem:[#allocation2 + $0xc] sm:$0xf] %vm889, %v884
        %894 = vrot.lane.b32.xlu0 %v487, 80
        %v895 = vpop.permute.xlu0 %894
        %896 = vrot.lane.b32.xlu0 %v488, 80
        %v897 = vpop.permute.xlu0 %896
        %898 = vrot.lane.b32.xlu0 %v487, 16
        %v899 = vpop.permute.xlu0 %898
        %900 = vrot.lane.b32.xlu0 %v488, 16
        %v901 = vpop.permute.xlu0 %900
        %v903 = vsel %vm497, %v895, 0
        %v906 = vsel %vm497, %v897, 0
        %v909 = vsel %vm497, %v899, 0
        %v912 = vsel %vm497, %v901, 0
        %914 = vmatpush.bf16.xpose.msra.mxu0 0
        %915 = vmatpush.bf16.xpose.msra.mxu0 0
        %916 = vmatpush.bf16.xpose.msra.mxu0 0
        %917 = vmatpush.bf16.xpose.msra.mxu0 0
        %918 = vmatpush.bf16.xpose.msra.mxu0 0
        %919 = vmatpush.bf16.xpose.msra.mxu0 0
        %920 = vmatpush.bf16.xpose.msra.mxu0 %v912
        %921 = vmatpush.bf16.xpose.msra.mxu0 %v909
        %922 = vmatmul.bf16.gmra.mxu0 %v903
        %v923 = vpop.f32.mrf.mxu0
        %v924 = vadd.f32 %v376, %v923
        %v925 = vpop.f32.mrf.mxu0
        %v926 = vadd.f32 %v377, %v925
        %927 = vmatmul.bf16.gmra.mxu0 %v906
        %v928 = vpop.f32.mrf.mxu0
        %v929 = vadd.f32 %v378, %v928
        %v930 = vpop.f32.mrf.mxu0
        %v931 = vadd.f32 %v379, %v930
        %932 = vdwg.mxu0
        %v933 = vsel %vm529, %v924, -inf
        %934 = vmax.xlane.f32.xlu0 %v933
        %v935 = vpop.xlane.xlu0 %934
        %v936 = vsel %vm529, %v926, -inf
        %937 = vmax.xlane.f32.xlu0 %v936
        %v938 = vpop.xlane.xlu0 %937
        %v939 = vsel %vm529, %v929, -inf
        %940 = vmax.xlane.f32.xlu0 %v939
        %v941 = vpop.xlane.xlu0 %940
        %v942 = vsel %vm529, %v931, -inf
        %943 = vmax.xlane.f32.xlu0 %v942
        %v944 = vpop.xlane.xlu0 %943
        %v945 = vsub.f32 %v924, %v935
        %v946 = vsub.f32 %v926, %v938
        %v947 = vsub.f32 %v929, %v941
        %v948 = vsub.f32 %v931, %v944
        %v949 = vmul.f32 %v945, 1.442695
        %v950 = vpow.pop %v949
        %v951 = vmul.f32 %v946, 1.442695
        %v952 = vpow.pop %v951
        %v953 = vmul.f32 %v947, 1.442695
        %v954 = vpow.pop %v953
        %v955 = vmul.f32 %v948, 1.442695
        %v956 = vpow.pop %v955
        %v957 = vsel %vm529, %v950, 0.0
        %958 = vadd.xlane.f32.xlu0 %v957
        %v959 = vpop.xlane.xlu0 %958
        %v960 = vsel %vm529, %v952, 0.0
        %961 = vadd.xlane.f32.xlu0 %v960
        %v962 = vpop.xlane.xlu0 %961
        %v963 = vsel %vm529, %v954, 0.0
        %964 = vadd.xlane.f32.xlu0 %v963
        %v965 = vpop.xlane.xlu0 %964
        %v966 = vsel %vm529, %v956, 0.0
        %967 = vadd.xlane.f32.xlu0 %v966
        %v968 = vpop.xlane.xlu0 %967
        %v969 = vrcp.pop %v959
        %v970 = vrcp.pop %v962
        %v971 = vrcp.pop %v965
        %v972 = vrcp.pop %v968
        %v973 = vmul.f32 %v950, %v969
        %v974 = vmul.f32 %v952, %v970
        %v975 = vmul.f32 %v954, %v971
        %v976 = vmul.f32 %v956, %v972
        %v977 = vpack.c.bf16 %v974, %v973
        %v978 = vpack.c.bf16 %v976, %v975
        %979 = vrot.lane.b32.xlu0 %v489, 80
        %v980 = vpop.permute.xlu0 %979
        %981 = vrot.lane.b32.xlu0 %v490, 80
        %v982 = vpop.permute.xlu0 %981
        %v986 = vsel %vm529, %v977, 0
        %v989 = vsel %vm529, %v978, 0
        %991 = vmatpush.bf16.msra.mxu0 0
        %992 = vmatpush.bf16.msra.mxu0 0
        %993 = vmatpush.bf16.msra.mxu0 0
        %994 = vmatpush.bf16.msra.mxu0 0
        %995 = vmatpush.bf16.msra.mxu0 0
        %996 = vmatpush.bf16.msra.mxu0 0
        %997 = vmatpush.bf16.msra.mxu0 %v982
        %998 = vmatpush.bf16.msra.mxu0 %v980
        %999 = vmatmul.bf16.gmra.mxu0 %v986
        %v1000 = vpop.f32.mrf.mxu0
        %v1001 = vadd.f32 0.0, %v1000
        %v1002 = vpop.f32.mrf.mxu0
        %v1003 = vadd.f32 0.0, %v1002
        %1004 = vmatmul.bf16.gmra.mxu0 %v989
        %v1005 = vpop.f32.mrf.mxu0
        %v1006 = vadd.f32 0.0, %v1005
        %v1007 = vpop.f32.mrf.mxu0
        %v1008 = vadd.f32 0.0, %v1007
        %1009 = vdwg.mxu0
        %v1010 = vpack.c.bf16 %v1001, %v1001
        %v1011 = vpack.c.bf16 %v1003, %v1003
        %v1012 = vpack.c.bf16 %v1006, %v1006
        %v1013 = vpack.c.bf16 %v1008, %v1008
        %1018 = vrot.lane.b32.xlu0 %v1010, 48
        %v1019 = vpop.permute.xlu0 %1018
        %1020 = vrot.lane.b32.xlu0 %v1011, 48
        %v1021 = vpop.permute.xlu0 %1020
        %1022 = vrot.lane.b32.xlu0 %v1012, 48
        %v1023 = vpop.permute.xlu0 %1022
        %1024 = vrot.lane.b32.xlu0 %v1013, 48
        %v1025 = vpop.permute.xlu0 %1024
        %vm1030 = vcmask 519552
        %1031 = vst.msk [vmem:[#allocation2] sm:$0xf] %vm1030, %v1019
        %1032 = vst.msk [vmem:[#allocation2 + $0x4] sm:$0xf] %vm1030, %v1021
        %1033 = vst.msk [vmem:[#allocation2 + $0x8] sm:$0xf] %vm1030, %v1023
        %1034 = vst.msk [vmem:[#allocation2 + $0xc] sm:$0xf] %vm1030, %v1025
        %v1035 = vld [vmem:[#allocation2] sm:$0xf]
        %v1036 = vld [vmem:[#allocation2 + $0x4] sm:$0xf]
        %v1037 = vld [vmem:[#allocation2 + $0x8] sm:$0xf]
        %v1038 = vld [vmem:[#allocation2 + $0xc] sm:$0xf]
        %v1039 = vld [vmem:[%s4] sm:$0xf]
        %v1040 = vld [vmem:[%s4 + $0x4] sm:$0xf]
        %v1041 = vld [vmem:[%s4 + $0x8] sm:$0xf]
        %v1042 = vld [vmem:[%s4 + $0xc] sm:$0xf]
        %v1043 = vld [vmem:[%s4 + $0x10] sm:$0xf]
        %v1044 = vld [vmem:[%s4 + $0x14] sm:$0xf]
        %v1045 = vld [vmem:[%s4 + $0x18] sm:$0xf]
        %v1046 = vld [vmem:[%s4 + $0x1c] sm:$0xf]
        %v1047 = vperm.slane %v481, 0
        %v1052 = vunpack.c.l.b16 %v1035
        %v1053 = vunpack.c.l.b16 %v1036
        %v1054 = vunpack.c.l.b16 %v1037
        %v1055 = vunpack.c.l.b16 %v1038
        %v1056 = vpack.c.b16 %v1053, %v1052
        %v1057 = vpack.c.b16 %v1055, %v1054
        %v1066 = vunpack.c.l.b16 %v1039
        %v1067 = vunpack.c.l.b16 %v1040
        %v1068 = vunpack.c.l.b16 %v1041
        %v1069 = vunpack.c.l.b16 %v1042
        %v1070 = vunpack.c.l.b16 %v1043
        %v1071 = vunpack.c.l.b16 %v1044
        %v1072 = vunpack.c.l.b16 %v1045
        %v1073 = vunpack.c.l.b16 %v1046
        %v1074 = vpack.c.b16 %v1067, %v1066
        %v1075 = vpack.c.b16 %v1069, %v1068
        %v1076 = vpack.c.b16 %v1071, %v1070
        %v1077 = vpack.c.b16 %v1073, %v1072
        %v1083 = vsel %vm436, %v1056, 0
        %v1086 = vsel %vm436, %v1057, 0
        %1088 = vmatpush.bf16.msra.mxu0 0
        %1089 = vmatpush.bf16.msra.mxu0 0
        %1090 = vmatpush.bf16.msra.mxu0 0
        %1091 = vmatpush.bf16.msra.mxu0 0
        %1092 = vmatpush.bf16.msra.mxu0 %v1077
        %1093 = vmatpush.bf16.msra.mxu0 %v1076
        %1094 = vmatpush.bf16.msra.mxu0 %v1075
        %1095 = vmatpush.bf16.msra.mxu0 %v1074
        %1096 = vmatmul.bf16.gmra.mxu0 %v1083
        %v1097 = vpop.f32.mrf.mxu0
        %v1098 = vadd.f32 %v1047, %v1097
        %v1099 = vpop.f32.mrf.mxu0
        %v1100 = vadd.f32 %v1047, %v1099
        %1101 = vmatmul.bf16.gmra.mxu0 %v1086
        %v1102 = vpop.f32.mrf.mxu0
        %v1103 = vadd.f32 %v1047, %v1102
        %v1104 = vpop.f32.mrf.mxu0
        %v1105 = vadd.f32 %v1047, %v1104
        %1106 = vdwg.mxu0
        %v1107 = vadd.f32 %v1098, %v372
        %v1108 = vadd.f32 %v1100, %v373
        %v1109 = vadd.f32 %v1103, %v374
        %v1110 = vadd.f32 %v1105, %v375
        %v1111 = vsel %vm436, %v1107, 0.0
        %1112 = vadd.xlane.f32.xlu0 %v1111
        %v1113 = vpop.xlane.xlu0 %1112
        %v1114 = vsel %vm436, %v1108, 0.0
        %1115 = vadd.xlane.f32.xlu0 %v1114
        %v1116 = vpop.xlane.xlu0 %1115
        %v1117 = vsel %vm436, %v1109, 0.0
        %1118 = vadd.xlane.f32.xlu0 %v1117
        %v1119 = vpop.xlane.xlu0 %1118
        %v1120 = vsel %vm436, %v1110, 0.0
        %1121 = vadd.xlane.f32.xlu0 %v1120
        %v1122 = vpop.xlane.xlu0 %1121
        %v1123 = vrcp.pop 64.0
        %v1124 = vmul.f32 64.0, %v1123
        %v1125 = vsub.f32 1.0, %v1124
        %v1126 = vmul.f32 %v1123, %v1125
        %v1127 = vadd.f32 %v1123, %v1126
        %vm1128 = vweird.f32 %v1123
        %v1129 = vsel %vm1128, %v1123, %v1127
        %v1130 = vmul.f32 %v1113, %v1129
        %v1131 = vmul.f32 %v1116, %v1129
        %v1132 = vmul.f32 %v1119, %v1129
        %v1133 = vmul.f32 %v1122, %v1129
        %v1134 = vsub.f32 %v1107, %v1130
        %v1135 = vsub.f32 %v1108, %v1131
        %v1136 = vsub.f32 %v1109, %v1132
        %v1137 = vsub.f32 %v1110, %v1133
        %v1138 = vmul.f32 %v1134, %v1134
        %v1139 = vmul.f32 %v1135, %v1135
        %v1140 = vmul.f32 %v1136, %v1136
        %v1141 = vmul.f32 %v1137, %v1137
        %v1142 = vsel %vm436, %v1138, 0.0
        %1143 = vadd.xlane.f32.xlu0 %v1142
        %v1144 = vpop.xlane.xlu0 %1143
        %v1145 = vsel %vm436, %v1139, 0.0
        %1146 = vadd.xlane.f32.xlu0 %v1145
        %v1147 = vpop.xlane.xlu0 %1146
        %v1148 = vsel %vm436, %v1140, 0.0
        %1149 = vadd.xlane.f32.xlu0 %v1148
        %v1150 = vpop.xlane.xlu0 %1149
        %v1151 = vsel %vm436, %v1141, 0.0
        %1152 = vadd.xlane.f32.xlu0 %v1151
        %v1153 = vpop.xlane.xlu0 %1152
        %v1154 = vmul.f32 %v1144, %v1129
        %v1155 = vmul.f32 %v1147, %v1129
        %v1156 = vmul.f32 %v1150, %v1129
        %v1157 = vmul.f32 %v1153, %v1129
        %v1158 = vadd.f32 %v1154, 1e-05
        %v1159 = vadd.f32 %v1155, 1e-05
        %v1160 = vadd.f32 %v1156, 1e-05
        %v1161 = vadd.f32 %v1157, 1e-05
        %v1162 = vrsqrt.pop %v1158
        %v1163 = vmul.f32 %v1162, %v1158
        %v1164 = vmul.f32 %v1163, %v1162
        %v1165 = vmul.f32 0.5, %v1164
        %v1166 = vsub.f32 1.5, %v1165
        %v1167 = vmul.f32 %v1162, %v1166
        %vm1168 = vweird.f32 %v1158
        %vm1169 = vweird.f32 %v1162
        %vm1170 = vmor %vm1168, %vm1169
        %v1171 = vsel %vm1170, %v1162, %v1167
        %v1172 = vrsqrt.pop %v1159
        %v1173 = vmul.f32 %v1172, %v1159
        %v1174 = vmul.f32 %v1173, %v1172
        %v1175 = vmul.f32 0.5, %v1174
        %v1176 = vsub.f32 1.5, %v1175
        %v1177 = vmul.f32 %v1172, %v1176
        %vm1178 = vweird.f32 %v1159
        %vm1179 = vweird.f32 %v1172
        %vm1180 = vmor %vm1178, %vm1179
        %v1181 = vsel %vm1180, %v1172, %v1177
        %v1182 = vrsqrt.pop %v1160
        %v1183 = vmul.f32 %v1182, %v1160
        %v1184 = vmul.f32 %v1183, %v1182
        %v1185 = vmul.f32 0.5, %v1184
        %v1186 = vsub.f32 1.5, %v1185
        %v1187 = vmul.f32 %v1182, %v1186
        %vm1188 = vweird.f32 %v1160
        %vm1189 = vweird.f32 %v1182
        %vm1190 = vmor %vm1188, %vm1189
        %v1191 = vsel %vm1190, %v1182, %v1187
        %v1192 = vrsqrt.pop %v1161
        %v1193 = vmul.f32 %v1192, %v1161
        %v1194 = vmul.f32 %v1193, %v1192
        %v1195 = vmul.f32 0.5, %v1194
        %v1196 = vsub.f32 1.5, %v1195
        %v1197 = vmul.f32 %v1192, %v1196
        %vm1198 = vweird.f32 %v1161
        %vm1199 = vweird.f32 %v1192
        %vm1200 = vmor %vm1198, %vm1199
        %v1201 = vsel %vm1200, %v1192, %v1197
        %v1202 = vmul.f32 %v1134, %v1171
        %v1203 = vmul.f32 %v1135, %v1181
        %v1204 = vmul.f32 %v1136, %v1191
        %v1205 = vmul.f32 %v1137, %v1201
        %v1206 = vperm.slane %v482, 0
        %v1207 = vmul.f32 %v1202, %v1206
        %v1208 = vmul.f32 %v1203, %v1206
        %v1209 = vmul.f32 %v1204, %v1206
        %v1210 = vmul.f32 %v1205, %v1206
        %v1211 = vperm.slane %v483, 0
        %v1212 = vadd.f32 %v1207, %v1211
        %v1213 = vadd.f32 %v1208, %v1211
        %v1214 = vadd.f32 %v1209, %v1211
        %v1215 = vadd.f32 %v1210, %v1211
        %v1216 = vpack.c.bf16 %v1213, %v1212
        %v1217 = vpack.c.bf16 %v1215, %v1214
        %v1218 = vld [vmem:[%s5] sm:$0xff]
        %v1219 = vld [vmem:[%s5 + $0x8] sm:$0xff]
        %v1220 = vld [vmem:[%s5 + $0x10] sm:$0xff]
        %v1221 = vld [vmem:[%s5 + $0x18] sm:$0xff]
        %v1222 = vld [vmem:[%s5 + $0x20] sm:$0xff]
        %v1223 = vld [vmem:[%s5 + $0x28] sm:$0xff]
        %v1224 = vld [vmem:[%s5 + $0x30] sm:$0xff]
        %v1225 = vld [vmem:[%s5 + $0x38] sm:$0xff]
        %v1226 = vld [vmem:[%s6] sm:$0x3]
        %v1228 = vperm.slane %v1226, 0
        %v1229 = vperm.slane %v1226, 1
        %v1240 = vunpack.c.l.b16 %v1218
        %v1241 = vunpack.c.h.b16 %v1218
        %v1242 = vunpack.c.l.b16 %v1219
        %v1243 = vunpack.c.h.b16 %v1219
        %v1244 = vunpack.c.l.b16 %v1220
        %v1245 = vunpack.c.h.b16 %v1220
        %v1246 = vunpack.c.l.b16 %v1221
        %v1247 = vunpack.c.h.b16 %v1221
        %v1248 = vunpack.c.l.b16 %v1222
        %v1249 = vunpack.c.h.b16 %v1222
        %v1250 = vunpack.c.l.b16 %v1223
        %v1251 = vunpack.c.h.b16 %v1223
        %v1252 = vunpack.c.l.b16 %v1224
        %v1253 = vunpack.c.h.b16 %v1224
        %v1254 = vunpack.c.l.b16 %v1225
        %v1255 = vunpack.c.h.b16 %v1225
        %v1256 = vpack.c.b16 %v1242, %v1240
        %v1257 = vpack.c.b16 %v1243, %v1241
        %v1258 = vpack.c.b16 %v1246, %v1244
        %v1259 = vpack.c.b16 %v1247, %v1245
        %v1260 = vpack.c.b16 %v1250, %v1248
        %v1261 = vpack.c.b16 %v1251, %v1249
        %v1262 = vpack.c.b16 %v1254, %v1252
        %v1263 = vpack.c.b16 %v1255, %v1253
        %v1273 = vsel %vm436, %v1216, 0
        %v1276 = vsel %vm436, %v1217, 0
        %1278 = vmatpush.bf16.msra.mxu0 0
        %1279 = vmatpush.bf16.msra.mxu0 0
        %1280 = vmatpush.bf16.msra.mxu0 0
        %1281 = vmatpush.bf16.msra.mxu0 0
        %1282 = vmatpush.bf16.msra.mxu0 %v1262
        %1283 = vmatpush.bf16.msra.mxu0 %v1260
        %1284 = vmatpush.bf16.msra.mxu0 %v1258
        %1285 = vmatpush.bf16.msra.mxu0 %v1256
        %1286 = vmatmul.bf16.gmra.mxu0 %v1273
        %v1287 = vpop.f32.mrf.mxu0
        %v1288 = vadd.f32 %v1228, %v1287
        %v1289 = vpop.f32.mrf.mxu0
        %v1290 = vadd.f32 %v1228, %v1289
        %1291 = vmatmul.bf16.gmra.mxu0 %v1276
        %v1292 = vpop.f32.mrf.mxu0
        %v1293 = vadd.f32 %v1228, %v1292
        %v1294 = vpop.f32.mrf.mxu0
        %v1295 = vadd.f32 %v1228, %v1294
        %1296 = vdwg.mxu0
        %1297 = vmatpush.bf16.msra.mxu0 0
        %1298 = vmatpush.bf16.msra.mxu0 0
        %1299 = vmatpush.bf16.msra.mxu0 0
        %1300 = vmatpush.bf16.msra.mxu0 0
        %1301 = vmatpush.bf16.msra.mxu0 %v1263
        %1302 = vmatpush.bf16.msra.mxu0 %v1261
        %1303 = vmatpush.bf16.msra.mxu0 %v1259
        %1304 = vmatpush.bf16.msra.mxu0 %v1257
        %1305 = vmatmul.bf16.gmra.mxu0 %v1273
        %v1306 = vpop.f32.mrf.mxu0
        %v1307 = vadd.f32 %v1229, %v1306
        %v1308 = vpop.f32.mrf.mxu0
        %v1309 = vadd.f32 %v1229, %v1308
        %1310 = vmatmul.bf16.gmra.mxu0 %v1276
        %v1311 = vpop.f32.mrf.mxu0
        %v1312 = vadd.f32 %v1229, %v1311
        %v1313 = vpop.f32.mrf.mxu0
        %v1314 = vadd.f32 %v1229, %v1313
        %1315 = vdwg.mxu0
        %v1316 = vmax.f32 %v1288, 0.0
        %v1317 = vmax.f32 %v1307, 0.0
        %v1318 = vmax.f32 %v1290, 0.0
        %v1319 = vmax.f32 %v1309, 0.0
        %v1320 = vmax.f32 %v1293, 0.0
        %v1321 = vmax.f32 %v1312, 0.0
        %v1322 = vmax.f32 %v1295, 0.0
        %v1323 = vmax.f32 %v1314, 0.0
        %v1324 = vpack.c.bf16 %v1318, %v1316
        %v1325 = vpack.c.bf16 %v1319, %v1317
        %v1326 = vpack.c.bf16 %v1322, %v1320
        %v1327 = vpack.c.bf16 %v1323, %v1321
        %v1328 = vld [vmem:[%s7] sm:$0xf]
        %v1329 = vld [vmem:[%s7 + $0x4] sm:$0xf]
        %v1330 = vld [vmem:[%s7 + $0x8] sm:$0xf]
        %v1331 = vld [vmem:[%s7 + $0xc] sm:$0xf]
        %v1332 = vld [vmem:[%s7 + $0x10] sm:$0xf]
        %v1333 = vld [vmem:[%s7 + $0x14] sm:$0xf]
        %v1334 = vld [vmem:[%s7 + $0x18] sm:$0xf]
        %v1335 = vld [vmem:[%s7 + $0x1c] sm:$0xf]
        %v1336 = vld [vmem:[%s7 + $0x20] sm:$0xf]
        %v1337 = vld [vmem:[%s7 + $0x24] sm:$0xf]
        %v1338 = vld [vmem:[%s7 + $0x28] sm:$0xf]
        %v1339 = vld [vmem:[%s7 + $0x2c] sm:$0xf]
        %v1340 = vld [vmem:[%s7 + $0x30] sm:$0xf]
        %v1341 = vld [vmem:[%s7 + $0x34] sm:$0xf]
        %v1342 = vld [vmem:[%s7 + $0x38] sm:$0xf]
        %v1343 = vld [vmem:[%s7 + $0x3c] sm:$0xf]
        %v1344 = vld [vmem:[%s7 + $0x40] sm:$0xf]
        %v1345 = vld [vmem:[%s7 + $0x44] sm:$0xf]
        %v1346 = vld [vmem:[%s7 + $0x48] sm:$0xf]
        %v1347 = vld [vmem:[%s7 + $0x4c] sm:$0xf]
        %v1348 = vld [vmem:[%s7 + $0x50] sm:$0xf]
        %v1349 = vld [vmem:[%s7 + $0x54] sm:$0xf]
        %v1350 = vld [vmem:[%s7 + $0x58] sm:$0xf]
        %v1351 = vld [vmem:[%s7 + $0x5c] sm:$0xf]
        %v1352 = vld [vmem:[%s7 + $0x60] sm:$0xf]
        %v1353 = vld [vmem:[%s7 + $0x64] sm:$0xf]
        %v1354 = vld [vmem:[%s7 + $0x68] sm:$0xf]
        %v1355 = vld [vmem:[%s7 + $0x6c] sm:$0xf]
        %v1356 = vld [vmem:[%s7 + $0x70] sm:$0xf]
        %v1357 = vld [vmem:[%s7 + $0x74] sm:$0xf]
        %v1358 = vld [vmem:[%s7 + $0x78] sm:$0xf]
        %v1359 = vld [vmem:[%s7 + $0x7c] sm:$0xf]
        %v1360 = vperm.slane %v484, 0
        %v1393 = vunpack.c.l.b16 %v1328
        %v1394 = vunpack.c.l.b16 %v1329
        %v1395 = vunpack.c.l.b16 %v1330
        %v1396 = vunpack.c.l.b16 %v1331
        %v1397 = vunpack.c.l.b16 %v1332
        %v1398 = vunpack.c.l.b16 %v1333
        %v1399 = vunpack.c.l.b16 %v1334
        %v1400 = vunpack.c.l.b16 %v1335
        %v1401 = vunpack.c.l.b16 %v1336
        %v1402 = vunpack.c.l.b16 %v1337
        %v1403 = vunpack.c.l.b16 %v1338
        %v1404 = vunpack.c.l.b16 %v1339
        %v1405 = vunpack.c.l.b16 %v1340
        %v1406 = vunpack.c.l.b16 %v1341
        %v1407 = vunpack.c.l.b16 %v1342
        %v1408 = vunpack.c.l.b16 %v1343
        %v1409 = vunpack.c.l.b16 %v1344
        %v1410 = vunpack.c.l.b16 %v1345
        %v1411 = vunpack.c.l.b16 %v1346
        %v1412 = vunpack.c.l.b16 %v1347
        %v1413 = vunpack.c.l.b16 %v1348
        %v1414 = vunpack.c.l.b16 %v1349
        %v1415 = vunpack.c.l.b16 %v1350
        %v1416 = vunpack.c.l.b16 %v1351
        %v1417 = vunpack.c.l.b16 %v1352
        %v1418 = vunpack.c.l.b16 %v1353
        %v1419 = vunpack.c.l.b16 %v1354
        %v1420 = vunpack.c.l.b16 %v1355
        %v1421 = vunpack.c.l.b16 %v1356
        %v1422 = vunpack.c.l.b16 %v1357
        %v1423 = vunpack.c.l.b16 %v1358
        %v1424 = vunpack.c.l.b16 %v1359
        %v1425 = vpack.c.b16 %v1394, %v1393
        %v1426 = vpack.c.b16 %v1396, %v1395
        %v1427 = vpack.c.b16 %v1398, %v1397
        %v1428 = vpack.c.b16 %v1400, %v1399
        %v1429 = vpack.c.b16 %v1402, %v1401
        %v1430 = vpack.c.b16 %v1404, %v1403
        %v1431 = vpack.c.b16 %v1406, %v1405
        %v1432 = vpack.c.b16 %v1408, %v1407
        %v1433 = vpack.c.b16 %v1410, %v1409
        %v1434 = vpack.c.b16 %v1412, %v1411
        %v1435 = vpack.c.b16 %v1414, %v1413
        %v1436 = vpack.c.b16 %v1416, %v1415
        %v1437 = vpack.c.b16 %v1418, %v1417
        %v1438 = vpack.c.b16 %v1420, %v1419
        %v1439 = vpack.c.b16 %v1422, %v1421
        %v1440 = vpack.c.b16 %v1424, %v1423
        %1457 = vmatpush.bf16.msra.mxu0 %v1432
        %1458 = vmatpush.bf16.msra.mxu0 %v1431
        %1459 = vmatpush.bf16.msra.mxu0 %v1430
        %1460 = vmatpush.bf16.msra.mxu0 %v1429
        %1461 = vmatpush.bf16.msra.mxu0 %v1428
        %1462 = vmatpush.bf16.msra.mxu0 %v1427
        %1463 = vmatpush.bf16.msra.mxu0 %v1426
        %1464 = vmatpush.bf16.msra.mxu0 %v1425
        %1465 = vmatmul.bf16.gmra.mxu0 %v1324
        %v1466 = vpop.f32.mrf.mxu0
        %v1467 = vadd.f32 %v1360, %v1466
        %v1468 = vpop.f32.mrf.mxu0
        %v1469 = vadd.f32 %v1360, %v1468
        %1470 = vmatmul.bf16.gmra.mxu0 %v1326
        %v1471 = vpop.f32.mrf.mxu0
        %v1472 = vadd.f32 %v1360, %v1471
        %v1473 = vpop.f32.mrf.mxu0
        %v1474 = vadd.f32 %v1360, %v1473
        %1475 = vdwg.mxu0
        %1476 = vmatpush.bf16.msra.mxu0 %v1440
        %1477 = vmatpush.bf16.msra.mxu0 %v1439
        %1478 = vmatpush.bf16.msra.mxu0 %v1438
        %1479 = vmatpush.bf16.msra.mxu0 %v1437
        %1480 = vmatpush.bf16.msra.mxu0 %v1436
        %1481 = vmatpush.bf16.msra.mxu0 %v1435
        %1482 = vmatpush.bf16.msra.mxu0 %v1434
        %1483 = vmatpush.bf16.msra.mxu0 %v1433
        %1484 = vmatmul.bf16.gmra.mxu0 %v1325
        %v1485 = vpop.f32.mrf.mxu0
        %v1486 = vadd.f32 %v1467, %v1485
        %v1487 = vpop.f32.mrf.mxu0
        %v1488 = vadd.f32 %v1469, %v1487
        %1489 = vmatmul.bf16.gmra.mxu0 %v1327
        %v1490 = vpop.f32.mrf.mxu0
        %v1491 = vadd.f32 %v1472, %v1490
        %v1492 = vpop.f32.mrf.mxu0
        %v1493 = vadd.f32 %v1474, %v1492
        %1494 = vdwg.mxu0
        %v1495 = vadd.f32 %v1212, %v1486
        %v1496 = vadd.f32 %v1213, %v1488
        %v1497 = vadd.f32 %v1214, %v1491
        %v1498 = vadd.f32 %v1215, %v1493
        %v1499 = vsel %vm436, %v1495, 0.0
        %1500 = vadd.xlane.f32.xlu0 %v1499
        %v1501 = vpop.xlane.xlu0 %1500
        %v1502 = vsel %vm436, %v1496, 0.0
        %1503 = vadd.xlane.f32.xlu0 %v1502
        %v1504 = vpop.xlane.xlu0 %1503
        %v1505 = vsel %vm436, %v1497, 0.0
        %1506 = vadd.xlane.f32.xlu0 %v1505
        %v1507 = vpop.xlane.xlu0 %1506
        %v1508 = vsel %vm436, %v1498, 0.0
        %1509 = vadd.xlane.f32.xlu0 %v1508
        %v1510 = vpop.xlane.xlu0 %1509
        %v1511 = vmul.f32 %v1501, %v1129
        %v1512 = vmul.f32 %v1504, %v1129
        %v1513 = vmul.f32 %v1507, %v1129
        %v1514 = vmul.f32 %v1510, %v1129
        %v1515 = vsub.f32 %v1495, %v1511
        %v1516 = vsub.f32 %v1496, %v1512
        %v1517 = vsub.f32 %v1497, %v1513
        %v1518 = vsub.f32 %v1498, %v1514
        %v1519 = vmul.f32 %v1515, %v1515
        %v1520 = vmul.f32 %v1516, %v1516
        %v1521 = vmul.f32 %v1517, %v1517
        %v1522 = vmul.f32 %v1518, %v1518
        %v1523 = vsel %vm436, %v1519, 0.0
        %1524 = vadd.xlane.f32.xlu0 %v1523
        %v1525 = vpop.xlane.xlu0 %1524
        %v1526 = vsel %vm436, %v1520, 0.0
        %1527 = vadd.xlane.f32.xlu0 %v1526
        %v1528 = vpop.xlane.xlu0 %1527
        %v1529 = vsel %vm436, %v1521, 0.0
        %1530 = vadd.xlane.f32.xlu0 %v1529
        %v1531 = vpop.xlane.xlu0 %1530
        %v1532 = vsel %vm436, %v1522, 0.0
        %1533 = vadd.xlane.f32.xlu0 %v1532
        %v1534 = vpop.xlane.xlu0 %1533
        %v1535 = vmul.f32 %v1525, %v1129
        %v1536 = vmul.f32 %v1528, %v1129
        %v1537 = vmul.f32 %v1531, %v1129
        %v1538 = vmul.f32 %v1534, %v1129
        %v1539 = vadd.f32 %v1535, 1e-05
        %v1540 = vadd.f32 %v1536, 1e-05
        %v1541 = vadd.f32 %v1537, 1e-05
        %v1542 = vadd.f32 %v1538, 1e-05
        %v1543 = vrsqrt.pop %v1539
        %v1544 = vmul.f32 %v1543, %v1539
        %v1545 = vmul.f32 %v1544, %v1543
        %v1546 = vmul.f32 0.5, %v1545
        %v1547 = vsub.f32 1.5, %v1546
        %v1548 = vmul.f32 %v1543, %v1547
        %vm1549 = vweird.f32 %v1539
        %vm1550 = vweird.f32 %v1543
        %vm1551 = vmor %vm1549, %vm1550
        %v1552 = vsel %vm1551, %v1543, %v1548
        %v1553 = vrsqrt.pop %v1540
        %v1554 = vmul.f32 %v1553, %v1540
        %v1555 = vmul.f32 %v1554, %v1553
        %v1556 = vmul.f32 0.5, %v1555
        %v1557 = vsub.f32 1.5, %v1556
        %v1558 = vmul.f32 %v1553, %v1557
        %vm1559 = vweird.f32 %v1540
        %vm1560 = vweird.f32 %v1553
        %vm1561 = vmor %vm1559, %vm1560
        %v1562 = vsel %vm1561, %v1553, %v1558
        %v1563 = vrsqrt.pop %v1541
        %v1564 = vmul.f32 %v1563, %v1541
        %v1565 = vmul.f32 %v1564, %v1563
        %v1566 = vmul.f32 0.5, %v1565
        %v1567 = vsub.f32 1.5, %v1566
        %v1568 = vmul.f32 %v1563, %v1567
        %vm1569 = vweird.f32 %v1541
        %vm1570 = vweird.f32 %v1563
        %vm1571 = vmor %vm1569, %vm1570
        %v1572 = vsel %vm1571, %v1563, %v1568
        %v1573 = vrsqrt.pop %v1542
        %v1574 = vmul.f32 %v1573, %v1542
        %v1575 = vmul.f32 %v1574, %v1573
        %v1576 = vmul.f32 0.5, %v1575
        %v1577 = vsub.f32 1.5, %v1576
        %v1578 = vmul.f32 %v1573, %v1577
        %vm1579 = vweird.f32 %v1542
        %vm1580 = vweird.f32 %v1573
        %vm1581 = vmor %vm1579, %vm1580
        %v1582 = vsel %vm1581, %v1573, %v1578
        %v1583 = vmul.f32 %v1515, %v1552
        %v1584 = vmul.f32 %v1516, %v1562
        %v1585 = vmul.f32 %v1517, %v1572
        %v1586 = vmul.f32 %v1518, %v1582
        %v1587 = vperm.slane %v485, 0
        %v1588 = vmul.f32 %v1583, %v1587
        %v1589 = vmul.f32 %v1584, %v1587
        %v1590 = vmul.f32 %v1585, %v1587
        %v1591 = vmul.f32 %v1586, %v1587
        %v1592 = vperm.slane %v486, 0
        %v1593 = vadd.f32 %v1588, %v1592
        %v1594 = vadd.f32 %v1589, %v1592
        %v1595 = vadd.f32 %v1590, %v1592
        %v1596 = vadd.f32 %v1591, %v1592
        %1597 = vst.msk [vmem:[%s357] sm:$0xff] %vm436, %v1593
        %1598 = vst.msk [vmem:[%s357 + $0x8] sm:$0xff] %vm436, %v1594
        %1599 = vst.msk [vmem:[%s357 + $0x10] sm:$0xff] %vm436, %v1595
        %1600 = vst.msk [vmem:[%s357 + $0x18] sm:$0xff] %vm436, %v1596
        %s1601 = sand.u32 %s231, 1
        %s1602 = scalar_lea.sflag [#allocation5], %s1601
        %s1603 = sand.u32 %s231, 1
        %s1604 = smul.addr %s1603, 32
        %s1605 = scalar_lea.vmem [#allocation6], %s1604
        // Predicated region
        $region61: #{tpu_custom_call.1} parent=55 // pred_check
          %p1606 = pneg %p241
        $region62: #{tpu_custom_call.1} parent=55 // pred_check_branch
          %1608 = sbr.rel (%p1606) target = $region64
        $region63: #{tpu_custom_call.1} parent=55 // pred_region
          %s1609 = smul.u32 4, %s24
          %1611 = vsyncadd %s1602, 0
          %s1612 = smul.addr %s1609, 8
          %s1613 = scalar_lea.hbm %s9, %s1612
          %s1614 = sshll.u32 %s1605, 4
          %s1615 = int_to_ptr.vmem [resolvable:$true] %s1614
          %s1616 = sshll.u32 %s1613, 4
          %s1617 = int_to_ptr.hbm [resolvable:$true] %s1616
          %1622 = dma.vmem_to_hbm [thread:$0]  %s1615, 512, %s1617, %s1602, 128, 128, 8
        $region64: #{tpu_custom_call.1} parent=55 // pred_fallthru
          _
      $region56: #{tpu_custom_call.1} parent=5 // pred_fallthru
        _
      %p1623 = scmp.le.s32.totalorder 2, %s19
      // Predicated region
      $region65: #{tpu_custom_call.1} parent=5 // pred_check
        %p1624 = pneg %p1623
      $region66: #{tpu_custom_call.1} parent=5 // pred_check_branch
        %1626 = sbr.rel (%p1624) target = $region68
      $region67: #{tpu_custom_call.1} parent=5 // pred_region
        %s1627 = ssub.s32 %s19, 2
        // Predicated region
        $region69: #{tpu_custom_call.1} parent=67 // pred_check
          %p1628 = pneg %p247
        $region70: #{tpu_custom_call.1} parent=67 // pred_check_branch
          %1630 = sbr.rel (%p1628) target = $region72
        $region71: #{tpu_custom_call.1} parent=67 // pred_region
          %s1631 = sand.u32 %s232, 1
          %s1632 = scalar_lea.sflag [#allocation5], %s1631
          %s1633 = sand.u32 %s232, 1
          %s1634 = smul.addr %s1633, 32
          %s1635 = scalar_lea.vmem [#allocation6], %s1634
          %1637 = dma.done %s1632, 512
        $region72: #{tpu_custom_call.1} parent=67 // pred_fallthru
          _
      $region68: #{tpu_custom_call.1} parent=5 // pred_fallthru
        _
    $region6: #{tpu_custom_call.1} parent=1 // loop_footer
      %s23 = sadd.s32 1, %s19
    $region7: #{tpu_custom_call.1} parent=1 // loop_footer_branch
      %18 = sbr.rel target = $region3
    $region8: #{tpu_custom_call.1} parent=1 // loop_exit
      _
    %1638 = vsyncpa [#allocation4], 1
    %s1639 = scalar_lea.sflag [#allocation4], 1
    %1640 = vsyncpa %s1639, 1
    %1641 = vsyncpa [#allocation5], 1
    %s1642 = scalar_lea.sflag [#allocation5], 1
    %1643 = vsyncpa %s1642, 1

</llo_original>
